<compile_context>
chip_gen: v7x
topology: tpu7x:2x2x1
jax: 0.10.0
libtpu: 0.0.40
codegen_flags: <defaults>
</compile_context>

<pallas_src>
import functools

import jax
import jax.numpy as jnp
from jax.experimental import pallas as pl
from jax.experimental.pallas import tpu as pltpu

_BN_EPS = 1e-5


# ----------------------------------------------------------------------------
# Kernel 1: global average pool (over packed channel segments) + Linear.
# ----------------------------------------------------------------------------
def _pool_linear_kernel(x_ref, w_ref, b_ref, o_ref, *, hw, k, inv_hw):
    """x_ref: (tb, C//k, k*hw); w_ref: (k, C//k, E_pad); b_ref: (1, E_pad);
    o_ref: (tb, E_pad). Channel c = r*k + j lives at row r, lane segment j."""
    e_pad = w_ref.shape[-1]
    tb = x_ref.shape[0]

    if k == 1:
        pooled = jnp.sum(x_ref[...], axis=-1)                      # (tb, C)
        acc = jnp.dot(pooled, w_ref[0], preferred_element_type=jnp.float32)
    else:
        x = x_ref[...]
        # Small (1, 1, L) lane-index mask, broadcast per segment (keeps the
        # iota out of VMEM at tile size).
        lane = jax.lax.broadcasted_iota(jnp.int32, (1, 1, k * hw), 2)
        acc = jnp.zeros((tb, e_pad), jnp.float32)
        for j in range(k):  # static unroll over channel-pack segments
            m = jnp.logical_and(lane >= j * hw, lane < (j + 1) * hw)
            pooled_j = jnp.sum(jnp.where(m, x, 0.0), axis=-1)      # (tb, C//k)
            acc = acc + jnp.dot(pooled_j, w_ref[j],
                                preferred_element_type=jnp.float32)

    # Fold the 1/HW pooling scale once, after the matmul (fewer VPU passes).
    o_ref[...] = acc * inv_hw + b_ref[...]


# ----------------------------------------------------------------------------
# Kernel 2: BatchNorm1d with batch statistics (train mode), single block.
# ----------------------------------------------------------------------------
def _batchnorm_kernel(x_ref, gamma_ref, beta_ref, o_ref):
    x = x_ref[...]                                                 # (B, E_pad)
    mu = jnp.mean(x, axis=0, keepdims=True)
    d = x - mu
    var = jnp.mean(d * d, axis=0, keepdims=True)                   # biased var
    o_ref[...] = gamma_ref[...] * (d * jax.lax.rsqrt(var + _BN_EPS)) + beta_ref[...]


def _batchnorm_train(lin, gamma_p, beta_p):
    B, E_pad = lin.shape
    # (B, E_pad) is tiny next to the feature map. Single-block Pallas kernel
    # unless the batch is unusually huge, then fall back to plain XLA.
    if B * E_pad * 4 > 4 * 1024 * 1024:
        mu = jnp.mean(lin, axis=0, keepdims=True)
        var = jnp.mean((lin - mu) ** 2, axis=0, keepdims=True)
        return gamma_p * (lin - mu) * jax.lax.rsqrt(var + _BN_EPS) + beta_p
    return pl.pallas_call(
        _batchnorm_kernel,
        out_shape=jax.ShapeDtypeStruct((B, E_pad), jnp.float32),
        compiler_params=pltpu.CompilerParams(vmem_limit_bytes=32 * 1024 * 1024),
    )(lin, gamma_p, beta_p)


# ----------------------------------------------------------------------------
# Static configuration helpers (all operate on Python ints at trace time).
# ----------------------------------------------------------------------------
def _lane_waste(n):
    return (pl.cdiv(n, 128) * 128) / float(n)


def _pick_channel_pack(C, HW):
    """Pack k channels per lane row so k*HW wastes less lane padding."""
    best_k, best_w = 1, _lane_waste(HW)
    for k in (2, 4, 8):
        if C % k:
            continue
        w = _lane_waste(k * HW)
        if w < best_w * 0.95:          # require a real improvement
            best_k, best_w = k, w
    return best_k


def _vmem_budget():
    """(scoped vmem_limit cap, per-x-tile byte target) per chip generation."""
    try:
        phys = int(pltpu.get_tpu_info().vmem_capacity_bytes)
    except Exception:
        phys = 64 * 1024 * 1024                      # conservative (v7x-sized)
    if phys >= 128 * 1024 * 1024:                    # v5e / v6e
        return 96 * 1024 * 1024, 16 * 1024 * 1024
    return 48 * 1024 * 1024, 10 * 1024 * 1024        # v7x (64 MiB physical)


def _pick_batch_tile(B, ck, L, target_bytes):
    """Largest multiple-of-8 divisor of B whose padded x tile fits target;
    falls back to the SMALLEST multiple-of-8 divisor (never to B) if none fit."""
    ck_pad = pl.cdiv(ck, 8) * 8
    l_pad = pl.cdiv(L, 128) * 128
    per_image = ck_pad * l_pad * 4
    mult8 = [d for d in range(8, B + 1, 8) if B % d == 0]
    if not mult8:
        return B                       # tiny/odd batches: single grid step
    fitting = [d for d in mult8 if d * per_image <= target_bytes]
    if fitting:
        return max(fitting)
    return min(mult8)                  # bound VMEM, keep DMA/compute pipelining


# ----------------------------------------------------------------------------
# Wrapper.
# ----------------------------------------------------------------------------
@functools.partial(jax.jit, static_argnames=("embed_size", "batch_tile"))
def encoder_cnn_forward(features_nchw, w_t, b, gamma, beta, *,
                        embed_size, batch_tile=None):
    """features_nchw: (B, C, H, W) trunk output; w_t: (C, E); returns (B, E)."""
    B, C, H, W = features_nchw.shape
    HW = H * W
    E = embed_size
    E_pad = pl.cdiv(E, 128) * 128
    pad_e = E_pad - E

    # Channel packing (free contiguous reshape; NO transpose of the big array).
    k = _pick_channel_pack(C, HW)
    Ck, L = C // k, k * HW
    x = features_nchw.reshape(B, Ck, L)

    # Epilogue params, zero-padded to a lane-dense embed dim. W rows permuted
    # to match the packed channel order: W_k[j, r, :] = W[r*k + j, :].
    w_p = jnp.pad(w_t.astype(jnp.float32), ((0, 0), (0, pad_e)))        # (C, E_pad)
    w_k = jnp.transpose(w_p.reshape(Ck, k, E_pad), (1, 0, 2))           # (k, Ck, E_pad)
    b_p = jnp.pad(b.astype(jnp.float32), (0, pad_e)).reshape(1, E_pad)
    g_p = jnp.pad(gamma.astype(jnp.float32), (0, pad_e)).reshape(1, E_pad)
    be_p = jnp.pad(beta.astype(jnp.float32), (0, pad_e)).reshape(1, E_pad)

    # Generation-aware VMEM budget + batch tile.
    vmem_cap, tile_target = _vmem_budget()
    tb = batch_tile if batch_tile is not None else _pick_batch_tile(
        B, Ck, L, tile_target)
    assert B % tb == 0, "batch tile must divide B"
    assert tb == B or tb % 8 == 0, "batch tile must be a multiple of 8 (or == B)"
    grid = (B // tb,)

    ck_pad = pl.cdiv(Ck, 8) * 8
    l_pad = pl.cdiv(L, 128) * 128
    tb_pad = pl.cdiv(tb, 8) * 8
    est = (2 * tb * ck_pad * l_pad * 4       # double-buffered x tiles
           + 2 * k * ck_pad * E_pad * 4      # W (grid-invariant, 2 bufs assumed)
           + 2 * 8 * E_pad * 4               # bias
           + 2 * tb_pad * E_pad * 4)         # output tiles
    vmem_limit = int(min(max(est * 2, 8 * 1024 * 1024), vmem_cap))

    lin = pl.pallas_call(
        functools.partial(_pool_linear_kernel, hw=HW, k=k, inv_hw=1.0 / float(HW)),
        out_shape=jax.ShapeDtypeStruct((B, E_pad), jnp.float32),
        grid_spec=pltpu.PrefetchScalarGridSpec(
            num_scalar_prefetch=0,
            grid=grid,
            in_specs=[
                pl.BlockSpec((tb, Ck, L), lambda i: (i, 0, 0)),      # x tile
                pl.BlockSpec((k, Ck, E_pad), lambda i: (0, 0, 0)),   # W (resident)
                pl.BlockSpec((1, E_pad), lambda i: (0, 0)),          # bias
            ],
            out_specs=pl.BlockSpec((tb, E_pad), lambda i: (i, 0)),   # lin tile
        ),
        compiler_params=pltpu.CompilerParams(
            dimension_semantics=("parallel",),    # no cross-tile dependency now
            vmem_limit_bytes=vmem_limit,
        ),
        cost_estimate=pl.CostEstimate(
            flops=2 * B * C * E_pad + B * C * HW,
            transcendentals=0,
            bytes_accessed=B * C * HW * 4 + C * E_pad * 4 + B * E_pad * 4,
        ),
    )(x, w_k, b_p)

    out_padded = _batchnorm_train(lin, g_p, be_p)
    return out_padded[:, :E]


# ----------------------------------------------------------------------------
# Pure-JAX reference (matches PyTorch forward semantics in train-mode BN).
# ----------------------------------------------------------------------------
def reference_forward(features_nchw, w_t, b, gamma, beta):
    B, C, H, W = features_nchw.shape
    pooled = jnp.mean(features_nchw.reshape(B, C, H * W), axis=-1)   # (B, C)
    lin = pooled @ w_t + b
    mu = jnp.mean(lin, axis=0, keepdims=True)
    var = jnp.mean((lin - mu) ** 2, axis=0, keepdims=True)
    return gamma * (lin - mu) / jnp.sqrt(var + _BN_EPS) + beta


if __name__ == "__main__":
    # Small shapes consistent with the module (real ResNet-152: C=2048, HW=49).
    B, C, H, W = 16, 128, 4, 4
    embed_size = 64

    key = jax.random.PRNGKey(0)
    k_feat, k_w = jax.random.split(key)

    # Stand-in for the ResNet-152 trunk output (deterministic synthetic features).
    features = jax.random.normal(k_feat, (B, C, H, W), dtype=jnp.float32)

    # Linear params per init_weights(): weight ~ N(0, 0.02), bias = 0.
    w = 0.02 * jax.random.normal(k_w, (embed_size, C), dtype=jnp.float32)  # (E, C)
    w_t = w.T                                                              # (C, E)
    b = jnp.zeros((embed_size,), dtype=jnp.float32)

    # BatchNorm1d affine params (PyTorch default init): gamma = 1, beta = 0.
    gamma = jnp.ones((embed_size,), dtype=jnp.float32)
    beta = jnp.zeros((embed_size,), dtype=jnp.float32)

    # batch_tile=8 -> 2 grid steps, exercising the tiled pool+linear pipeline
    # (channel packing kicks in too: HW=16 -> k=8, fully lane-dense x tiles).
    out = encoder_cnn_forward(features, w_t, b, gamma, beta,
                              embed_size=embed_size, batch_tile=8)
    out = jax.block_until_ready(out)

    ref = reference_forward(features, w_t, b, gamma, beta)
    assert out.shape == (B, embed_size)
    assert jnp.allclose(out, ref, atol=1e-4, rtol=1e-4), "mismatch vs reference"

    print("KERNEL_OK")
</pallas_src>

<mosaic_0001>
module attributes {stable_mosaic.version = 11 : i64} {
  func.func @_pool_linear_kernel(%arg0: i32, %arg1: memref<8x16x128xf32, #tpu.memory_space<vmem>>, %arg2: memref<8x16x128xf32, #tpu.memory_space<vmem>>, %arg3: memref<1x128xf32, #tpu.memory_space<vmem>>, %arg4: memref<8x128xf32, #tpu.memory_space<vmem>>) attributes {dimension_semantics = [#tpu.dimension_semantics<parallel>], iteration_bounds = array<i64: 2>, scalar_prefetch = 0 : i64, scratch_operands = 0 : i64, tpu.core_type = #tpu.core_type<tc>, window_params = [{transform_indices = @transform_0, window_bounds = array<i64: 8, 16, 128>}, {pipeline_mode = #tpu.pipeline_mode<synchronous>, transform_indices = @transform_1, window_bounds = array<i64: 8, 16, 128>}, {pipeline_mode = #tpu.pipeline_mode<synchronous>, transform_indices = @transform_2, window_bounds = array<i64: 1, 128>}, {transform_indices = @transform_3, window_bounds = array<i64: 8, 128>}]} {
    %c0 = arith.constant 0 : index
    %c0_0 = arith.constant 0 : index
    %c0_1 = arith.constant 0 : index
    %0 = vector.load %arg1[%c0, %c0_0, %c0_1] : memref<8x16x128xf32, #tpu.memory_space<vmem>>, vector<8x16x128xf32>
    %1 = tpu.iota {dimensions = array<i32: 2>} : vector<1x1x128xi32>
    %cst = arith.constant 0.000000e+00 : f32
    %2 = vector.broadcast %cst : f32 to vector<8x128xf32>
    %c0_i32 = arith.constant 0 : i32
    %3 = vector.broadcast %c0_i32 : i32 to vector<1x1x128xi32>
    %4 = arith.cmpi sge, %1, %3 : vector<1x1x128xi32>
    %c16_i32 = arith.constant 16 : i32
    %5 = vector.broadcast %c16_i32 : i32 to vector<1x1x128xi32>
    %6 = arith.cmpi slt, %1, %5 : vector<1x1x128xi32>
    %7 = arith.andi %4, %6 : vector<1x1x128xi1>
    %cst_2 = arith.constant 0.000000e+00 : f32
    %8 = vector.shape_cast %7 : vector<1x1x128xi1> to vector<1x1x128xi1>
    %9 = vector.broadcast %8 : vector<1x1x128xi1> to vector<8x16x128xi1>
    %10 = vector.broadcast %cst_2 : f32 to vector<8x16x128xf32>
    %11 = arith.select %9, %0, %10 : vector<8x16x128xi1>, vector<8x16x128xf32>
    %cst_3 = arith.constant dense<0.000000e+00> : vector<8x16xf32>
    %12 = vector.multi_reduction <add>, %11, %cst_3 [2] : vector<8x16x128xf32> to vector<8x16xf32>
    %c0_4 = arith.constant 0 : index
    %c0_5 = arith.constant 0 : index
    %c0_6 = arith.constant 0 : index
    %13 = vector.load %arg2[%c0_4, %c0_5, %c0_6] : memref<8x16x128xf32, #tpu.memory_space<vmem>>, vector<1x16x128xf32>
    %14 = vector.shape_cast %13 : vector<1x16x128xf32> to vector<16x128xf32>
    %cst_7 = arith.constant dense<0.000000e+00> : vector<8x128xf32>
    %15 = tpu.matmul %12, %14, %cst_7 {dimension_numbers = #tpu.dot_dimension_numbers<[1], [0], [0], [1], [0, 0, 1, 1], [], []>} : vector<8x16xf32>, vector<16x128xf32>, vector<8x128xf32> -> vector<8x128xf32>
    %16 = arith.addf %2, %15 : vector<8x128xf32>
    %c16_i32_8 = arith.constant 16 : i32
    %17 = vector.broadcast %c16_i32_8 : i32 to vector<1x1x128xi32>
    %18 = arith.cmpi sge, %1, %17 : vector<1x1x128xi32>
    %c32_i32 = arith.constant 32 : i32
    %19 = vector.broadcast %c32_i32 : i32 to vector<1x1x128xi32>
    %20 = arith.cmpi slt, %1, %19 : vector<1x1x128xi32>
    %21 = arith.andi %18, %20 : vector<1x1x128xi1>
    %cst_9 = arith.constant 0.000000e+00 : f32
    %22 = vector.shape_cast %21 : vector<1x1x128xi1> to vector<1x1x128xi1>
    %23 = vector.broadcast %22 : vector<1x1x128xi1> to vector<8x16x128xi1>
    %24 = vector.broadcast %cst_9 : f32 to vector<8x16x128xf32>
    %25 = arith.select %23, %0, %24 : vector<8x16x128xi1>, vector<8x16x128xf32>
    %cst_10 = arith.constant dense<0.000000e+00> : vector<8x16xf32>
    %26 = vector.multi_reduction <add>, %25, %cst_10 [2] : vector<8x16x128xf32> to vector<8x16xf32>
    %c1 = arith.constant 1 : index
    %c0_11 = arith.constant 0 : index
    %c0_12 = arith.constant 0 : index
    %27 = vector.load %arg2[%c1, %c0_11, %c0_12] : memref<8x16x128xf32, #tpu.memory_space<vmem>>, vector<1x16x128xf32>
    %28 = vector.shape_cast %27 : vector<1x16x128xf32> to vector<16x128xf32>
    %cst_13 = arith.constant dense<0.000000e+00> : vector<8x128xf32>
    %29 = tpu.matmul %26, %28, %cst_13 {dimension_numbers = #tpu.dot_dimension_numbers<[1], [0], [0], [1], [0, 0, 1, 1], [], []>} : vector<8x16xf32>, vector<16x128xf32>, vector<8x128xf32> -> vector<8x128xf32>
    %30 = arith.addf %16, %29 : vector<8x128xf32>
    %c32_i32_14 = arith.constant 32 : i32
    %31 = vector.broadcast %c32_i32_14 : i32 to vector<1x1x128xi32>
    %32 = arith.cmpi sge, %1, %31 : vector<1x1x128xi32>
    %c48_i32 = arith.constant 48 : i32
    %33 = vector.broadcast %c48_i32 : i32 to vector<1x1x128xi32>
    %34 = arith.cmpi slt, %1, %33 : vector<1x1x128xi32>
    %35 = arith.andi %32, %34 : vector<1x1x128xi1>
    %cst_15 = arith.constant 0.000000e+00 : f32
    %36 = vector.shape_cast %35 : vector<1x1x128xi1> to vector<1x1x128xi1>
    %37 = vector.broadcast %36 : vector<1x1x128xi1> to vector<8x16x128xi1>
    %38 = vector.broadcast %cst_15 : f32 to vector<8x16x128xf32>
    %39 = arith.select %37, %0, %38 : vector<8x16x128xi1>, vector<8x16x128xf32>
    %cst_16 = arith.constant dense<0.000000e+00> : vector<8x16xf32>
    %40 = vector.multi_reduction <add>, %39, %cst_16 [2] : vector<8x16x128xf32> to vector<8x16xf32>
    %c2 = arith.constant 2 : index
    %c0_17 = arith.constant 0 : index
    %c0_18 = arith.constant 0 : index
    %41 = vector.load %arg2[%c2, %c0_17, %c0_18] : memref<8x16x128xf32, #tpu.memory_space<vmem>>, vector<1x16x128xf32>
    %42 = vector.shape_cast %41 : vector<1x16x128xf32> to vector<16x128xf32>
    %cst_19 = arith.constant dense<0.000000e+00> : vector<8x128xf32>
    %43 = tpu.matmul %40, %42, %cst_19 {dimension_numbers = #tpu.dot_dimension_numbers<[1], [0], [0], [1], [0, 0, 1, 1], [], []>} : vector<8x16xf32>, vector<16x128xf32>, vector<8x128xf32> -> vector<8x128xf32>
    %44 = arith.addf %30, %43 : vector<8x128xf32>
    %c48_i32_20 = arith.constant 48 : i32
    %45 = vector.broadcast %c48_i32_20 : i32 to vector<1x1x128xi32>
    %46 = arith.cmpi sge, %1, %45 : vector<1x1x128xi32>
    %c64_i32 = arith.constant 64 : i32
    %47 = vector.broadcast %c64_i32 : i32 to vector<1x1x128xi32>
    %48 = arith.cmpi slt, %1, %47 : vector<1x1x128xi32>
    %49 = arith.andi %46, %48 : vector<1x1x128xi1>
    %cst_21 = arith.constant 0.000000e+00 : f32
    %50 = vector.shape_cast %49 : vector<1x1x128xi1> to vector<1x1x128xi1>
    %51 = vector.broadcast %50 : vector<1x1x128xi1> to vector<8x16x128xi1>
    %52 = vector.broadcast %cst_21 : f32 to vector<8x16x128xf32>
    %53 = arith.select %51, %0, %52 : vector<8x16x128xi1>, vector<8x16x128xf32>
    %cst_22 = arith.constant dense<0.000000e+00> : vector<8x16xf32>
    %54 = vector.multi_reduction <add>, %53, %cst_22 [2] : vector<8x16x128xf32> to vector<8x16xf32>
    %c3 = arith.constant 3 : index
    %c0_23 = arith.constant 0 : index
    %c0_24 = arith.constant 0 : index
    %55 = vector.load %arg2[%c3, %c0_23, %c0_24] : memref<8x16x128xf32, #tpu.memory_space<vmem>>, vector<1x16x128xf32>
    %56 = vector.shape_cast %55 : vector<1x16x128xf32> to vector<16x128xf32>
    %cst_25 = arith.constant dense<0.000000e+00> : vector<8x128xf32>
    %57 = tpu.matmul %54, %56, %cst_25 {dimension_numbers = #tpu.dot_dimension_numbers<[1], [0], [0], [1], [0, 0, 1, 1], [], []>} : vector<8x16xf32>, vector<16x128xf32>, vector<8x128xf32> -> vector<8x128xf32>
    %58 = arith.addf %44, %57 : vector<8x128xf32>
    %c64_i32_26 = arith.constant 64 : i32
    %59 = vector.broadcast %c64_i32_26 : i32 to vector<1x1x128xi32>
    %60 = arith.cmpi sge, %1, %59 : vector<1x1x128xi32>
    %c80_i32 = arith.constant 80 : i32
    %61 = vector.broadcast %c80_i32 : i32 to vector<1x1x128xi32>
    %62 = arith.cmpi slt, %1, %61 : vector<1x1x128xi32>
    %63 = arith.andi %60, %62 : vector<1x1x128xi1>
    %cst_27 = arith.constant 0.000000e+00 : f32
    %64 = vector.shape_cast %63 : vector<1x1x128xi1> to vector<1x1x128xi1>
    %65 = vector.broadcast %64 : vector<1x1x128xi1> to vector<8x16x128xi1>
    %66 = vector.broadcast %cst_27 : f32 to vector<8x16x128xf32>
    %67 = arith.select %65, %0, %66 : vector<8x16x128xi1>, vector<8x16x128xf32>
    %cst_28 = arith.constant dense<0.000000e+00> : vector<8x16xf32>
    %68 = vector.multi_reduction <add>, %67, %cst_28 [2] : vector<8x16x128xf32> to vector<8x16xf32>
    %c4 = arith.constant 4 : index
    %c0_29 = arith.constant 0 : index
    %c0_30 = arith.constant 0 : index
    %69 = vector.load %arg2[%c4, %c0_29, %c0_30] : memref<8x16x128xf32, #tpu.memory_space<vmem>>, vector<1x16x128xf32>
    %70 = vector.shape_cast %69 : vector<1x16x128xf32> to vector<16x128xf32>
    %cst_31 = arith.constant dense<0.000000e+00> : vector<8x128xf32>
    %71 = tpu.matmul %68, %70, %cst_31 {dimension_numbers = #tpu.dot_dimension_numbers<[1], [0], [0], [1], [0, 0, 1, 1], [], []>} : vector<8x16xf32>, vector<16x128xf32>, vector<8x128xf32> -> vector<8x128xf32>
    %72 = arith.addf %58, %71 : vector<8x128xf32>
    %c80_i32_32 = arith.constant 80 : i32
    %73 = vector.broadcast %c80_i32_32 : i32 to vector<1x1x128xi32>
    %74 = arith.cmpi sge, %1, %73 : vector<1x1x128xi32>
    %c96_i32 = arith.constant 96 : i32
    %75 = vector.broadcast %c96_i32 : i32 to vector<1x1x128xi32>
    %76 = arith.cmpi slt, %1, %75 : vector<1x1x128xi32>
    %77 = arith.andi %74, %76 : vector<1x1x128xi1>
    %cst_33 = arith.constant 0.000000e+00 : f32
    %78 = vector.shape_cast %77 : vector<1x1x128xi1> to vector<1x1x128xi1>
    %79 = vector.broadcast %78 : vector<1x1x128xi1> to vector<8x16x128xi1>
    %80 = vector.broadcast %cst_33 : f32 to vector<8x16x128xf32>
    %81 = arith.select %79, %0, %80 : vector<8x16x128xi1>, vector<8x16x128xf32>
    %cst_34 = arith.constant dense<0.000000e+00> : vector<8x16xf32>
    %82 = vector.multi_reduction <add>, %81, %cst_34 [2] : vector<8x16x128xf32> to vector<8x16xf32>
    %c5 = arith.constant 5 : index
    %c0_35 = arith.constant 0 : index
    %c0_36 = arith.constant 0 : index
    %83 = vector.load %arg2[%c5, %c0_35, %c0_36] : memref<8x16x128xf32, #tpu.memory_space<vmem>>, vector<1x16x128xf32>
    %84 = vector.shape_cast %83 : vector<1x16x128xf32> to vector<16x128xf32>
    %cst_37 = arith.constant dense<0.000000e+00> : vector<8x128xf32>
    %85 = tpu.matmul %82, %84, %cst_37 {dimension_numbers = #tpu.dot_dimension_numbers<[1], [0], [0], [1], [0, 0, 1, 1], [], []>} : vector<8x16xf32>, vector<16x128xf32>, vector<8x128xf32> -> vector<8x128xf32>
    %86 = arith.addf %72, %85 : vector<8x128xf32>
    %c96_i32_38 = arith.constant 96 : i32
    %87 = vector.broadcast %c96_i32_38 : i32 to vector<1x1x128xi32>
    %88 = arith.cmpi sge, %1, %87 : vector<1x1x128xi32>
    %c112_i32 = arith.constant 112 : i32
    %89 = vector.broadcast %c112_i32 : i32 to vector<1x1x128xi32>
    %90 = arith.cmpi slt, %1, %89 : vector<1x1x128xi32>
    %91 = arith.andi %88, %90 : vector<1x1x128xi1>
    %cst_39 = arith.constant 0.000000e+00 : f32
    %92 = vector.shape_cast %91 : vector<1x1x128xi1> to vector<1x1x128xi1>
    %93 = vector.broadcast %92 : vector<1x1x128xi1> to vector<8x16x128xi1>
    %94 = vector.broadcast %cst_39 : f32 to vector<8x16x128xf32>
    %95 = arith.select %93, %0, %94 : vector<8x16x128xi1>, vector<8x16x128xf32>
    %cst_40 = arith.constant dense<0.000000e+00> : vector<8x16xf32>
    %96 = vector.multi_reduction <add>, %95, %cst_40 [2] : vector<8x16x128xf32> to vector<8x16xf32>
    %c6 = arith.constant 6 : index
    %c0_41 = arith.constant 0 : index
    %c0_42 = arith.constant 0 : index
    %97 = vector.load %arg2[%c6, %c0_41, %c0_42] : memref<8x16x128xf32, #tpu.memory_space<vmem>>, vector<1x16x128xf32>
    %98 = vector.shape_cast %97 : vector<1x16x128xf32> to vector<16x128xf32>
    %cst_43 = arith.constant dense<0.000000e+00> : vector<8x128xf32>
    %99 = tpu.matmul %96, %98, %cst_43 {dimension_numbers = #tpu.dot_dimension_numbers<[1], [0], [0], [1], [0, 0, 1, 1], [], []>} : vector<8x16xf32>, vector<16x128xf32>, vector<8x128xf32> -> vector<8x128xf32>
    %100 = arith.addf %86, %99 : vector<8x128xf32>
    %c112_i32_44 = arith.constant 112 : i32
    %101 = vector.broadcast %c112_i32_44 : i32 to vector<1x1x128xi32>
    %102 = arith.cmpi sge, %1, %101 : vector<1x1x128xi32>
    %c128_i32 = arith.constant 128 : i32
    %103 = vector.broadcast %c128_i32 : i32 to vector<1x1x128xi32>
    %104 = arith.cmpi slt, %1, %103 : vector<1x1x128xi32>
    %105 = arith.andi %102, %104 : vector<1x1x128xi1>
    %cst_45 = arith.constant 0.000000e+00 : f32
    %106 = vector.shape_cast %105 : vector<1x1x128xi1> to vector<1x1x128xi1>
    %107 = vector.broadcast %106 : vector<1x1x128xi1> to vector<8x16x128xi1>
    %108 = vector.broadcast %cst_45 : f32 to vector<8x16x128xf32>
    %109 = arith.select %107, %0, %108 : vector<8x16x128xi1>, vector<8x16x128xf32>
    %cst_46 = arith.constant dense<0.000000e+00> : vector<8x16xf32>
    %110 = vector.multi_reduction <add>, %109, %cst_46 [2] : vector<8x16x128xf32> to vector<8x16xf32>
    %c7 = arith.constant 7 : index
    %c0_47 = arith.constant 0 : index
    %c0_48 = arith.constant 0 : index
    %111 = vector.load %arg2[%c7, %c0_47, %c0_48] : memref<8x16x128xf32, #tpu.memory_space<vmem>>, vector<1x16x128xf32>
    %112 = vector.shape_cast %111 : vector<1x16x128xf32> to vector<16x128xf32>
    %cst_49 = arith.constant dense<0.000000e+00> : vector<8x128xf32>
    %113 = tpu.matmul %110, %112, %cst_49 {dimension_numbers = #tpu.dot_dimension_numbers<[1], [0], [0], [1], [0, 0, 1, 1], [], []>} : vector<8x16xf32>, vector<16x128xf32>, vector<8x128xf32> -> vector<8x128xf32>
    %114 = arith.addf %100, %113 : vector<8x128xf32>
    %cst_50 = arith.constant 6.250000e-02 : f32
    %115 = vector.broadcast %cst_50 : f32 to vector<8x128xf32>
    %116 = arith.mulf %114, %115 : vector<8x128xf32>
    %c0_51 = arith.constant 0 : index
    %c0_52 = arith.constant 0 : index
    %117 = vector.load %arg3[%c0_51, %c0_52] : memref<1x128xf32, #tpu.memory_space<vmem>>, vector<1x128xf32>
    %118 = vector.broadcast %117 : vector<1x128xf32> to vector<8x128xf32>
    %119 = arith.addf %116, %118 : vector<8x128xf32>
    %c0_53 = arith.constant 0 : index
    %c0_54 = arith.constant 0 : index
    %120 = vector.load %arg4[%c0_53, %c0_54] : memref<8x128xf32, #tpu.memory_space<vmem>>, vector<8x128xf32>
    tpu.vector_store %arg4[%c0_53, %c0_54], %119 {strides = array<i32>} : memref<8x128xf32, #tpu.memory_space<vmem>>, vector<8x128xf32>,
    return
  }
  func.func @transform_0(%arg0: i32) -> (i32, i32, i32) {
    %c0_i32 = arith.constant 0 : i32
    %c0_i32_0 = arith.constant 0 : i32
    %c0_i32_1 = arith.constant 0 : i32
    return %arg0, %c0_i32, %c0_i32_0 : i32, i32, i32
  }
  func.func @transform_1(%arg0: i32) -> (i32, i32, i32) {
    %c0_i32 = arith.constant 0 : i32
    %c0_i32_0 = arith.constant 0 : i32
    %c0_i32_1 = arith.constant 0 : i32
    %c0_i32_2 = arith.constant 0 : i32
    return %c0_i32, %c0_i32_0, %c0_i32_1 : i32, i32, i32
  }
  func.func @transform_2(%arg0: i32) -> (i32, i32) {
    %c0_i32 = arith.constant 0 : i32
    %c0_i32_0 = arith.constant 0 : i32
    %c0_i32_1 = arith.constant 0 : i32
    return %c0_i32, %c0_i32_0 : i32, i32
  }
  func.func @transform_3(%arg0: i32) -> (i32, i32) {
    %c0_i32 = arith.constant 0 : i32
    %c0_i32_0 = arith.constant 0 : i32
    return %arg0, %c0_i32 : i32, i32
  }
}

module attributes {stable_mosaic.version = 11 : i64} {
  func.func @_batchnorm_kernel(%arg0: memref<16x128xf32, #tpu.memory_space<vmem>>, %arg1: memref<1x128xf32, #tpu.memory_space<vmem>>, %arg2: memref<1x128xf32, #tpu.memory_space<vmem>>, %arg3: memref<16x128xf32, #tpu.memory_space<vmem>>) attributes {dimension_semantics = [], scalar_prefetch = 0 : i64, scratch_operands = 0 : i64, tpu.core_type = #tpu.core_type<tc>} {
    %c0 = arith.constant 0 : index
    %c0_0 = arith.constant 0 : index
    %0 = vector.load %arg0[%c0, %c0_0] : memref<16x128xf32, #tpu.memory_space<vmem>>, vector<16x128xf32>
    %cst = arith.constant dense<0.000000e+00> : vector<128xf32>
    %1 = vector.multi_reduction <add>, %0, %cst [0] : vector<16x128xf32> to vector<128xf32>
    %2 = vector.shape_cast %1 : vector<128xf32> to vector<1x128xf32>
    %cst_1 = arith.constant 1.600000e+01 : f32
    %3 = vector.broadcast %cst_1 : f32 to vector<1x128xf32>
    %4 = arith.divf %2, %3 : vector<1x128xf32>
    %5 = vector.broadcast %4 : vector<1x128xf32> to vector<16x128xf32>
    %6 = arith.subf %0, %5 : vector<16x128xf32>
    %7 = arith.mulf %6, %6 : vector<16x128xf32>
    %cst_2 = arith.constant dense<0.000000e+00> : vector<128xf32>
    %8 = vector.multi_reduction <add>, %7, %cst_2 [0] : vector<16x128xf32> to vector<128xf32>
    %9 = vector.shape_cast %8 : vector<128xf32> to vector<1x128xf32>
    %cst_3 = arith.constant 1.600000e+01 : f32
    %10 = vector.broadcast %cst_3 : f32 to vector<1x128xf32>
    %11 = arith.divf %9, %10 : vector<1x128xf32>
    %c0_4 = arith.constant 0 : index
    %c0_5 = arith.constant 0 : index
    %12 = vector.load %arg1[%c0_4, %c0_5] : memref<1x128xf32, #tpu.memory_space<vmem>>, vector<1x128xf32>
    %cst_6 = arith.constant 9.99999974E-6 : f32
    %13 = vector.broadcast %cst_6 : f32 to vector<1x128xf32>
    %14 = arith.addf %11, %13 : vector<1x128xf32>
    %15 = math.rsqrt %14 : vector<1x128xf32>
    %16 = vector.broadcast %15 : vector<1x128xf32> to vector<16x128xf32>
    %17 = arith.mulf %6, %16 : vector<16x128xf32>
    %18 = vector.broadcast %12 : vector<1x128xf32> to vector<16x128xf32>
    %19 = arith.mulf %18, %17 : vector<16x128xf32>
    %c0_7 = arith.constant 0 : index
    %c0_8 = arith.constant 0 : index
    %20 = vector.load %arg2[%c0_7, %c0_8] : memref<1x128xf32, #tpu.memory_space<vmem>>, vector<1x128xf32>
    %21 = vector.broadcast %20 : vector<1x128xf32> to vector<16x128xf32>
    %22 = arith.addf %19, %21 : vector<16x128xf32>
    %c0_9 = arith.constant 0 : index
    %c0_10 = arith.constant 0 : index
    %23 = vector.load %arg3[%c0_9, %c0_10] : memref<16x128xf32, #tpu.memory_space<vmem>>, vector<16x128xf32>
    tpu.vector_store %arg3[%c0_9, %c0_10], %22 {strides = array<i32>} : memref<16x128xf32, #tpu.memory_space<vmem>>, vector<16x128xf32>,
    return
  }
}

</mosaic_0001>

<llo_original>
// kernel: encoder_cnn_forward.3
$region0: #{encoder_cnn_forward.3}
  #allocation0 [shape = 'u32[]', space=smem, size = 0x4, offset = 0x4, fixed_abs, tag = 'smem constant byte address 0x4 - core index']
  #allocation1 [shape = 'u32[144,128]{1,0:T(1,128)}', space=vmem, size = 0x12000, scoped, tag = 'internal scratch']
  %s0 = inlined_call_operand.vmem [shape: f32[16,128], index: 0, kind: input, shape index: {}]
  %s1 = inlined_call_operand.vmem [shape: f32[1,128], index: 1, kind: input, shape index: {}]
  %s2 = inlined_call_operand.vmem [shape: f32[1,128], index: 2, kind: input, shape index: {}]
  %s3 = inlined_call_operand.hbm [shape: f32[16,128], index: 3, kind: output, shape index: {}]
  %s4 = sld [smem:[#allocation0]]
  $region22: #{encoder_cnn_forward.3} parent=0
    _
  %s6 = ssub.s32 1, %s4
  %s7 = scalar_select 0, %s6, %s4
  $region1: #{encoder_cnn_forward.3} parent=0
    #allocation2 [shape = 'u8[8192]{0}', space=vmem, size = 0x2000, scoped, tag = 'output window, operand 0, single buffered']
    #allocation3 [shape = 's32[1]{0}', space=sflag, size = 0x4, scoped, tag = 'scoped memory for encoder_cnn_forward.3']
    %8 = vsyncpa [#allocation3], 0
    // Predicated region
    $region2: #{encoder_cnn_forward.3} parent=1 // pred_check
      _
    $region3: #{encoder_cnn_forward.3} parent=1 // pred_check_branch
      %10 = sbr.rel (0) target = $region5
    $region4: #{encoder_cnn_forward.3} parent=1 // pred_region
      _
    $region5: #{encoder_cnn_forward.3} parent=1 // pred_fallthru
      _
    // Predicated region
    $region6: #{encoder_cnn_forward.3} parent=1 // pred_check
      _
    $region7: #{encoder_cnn_forward.3} parent=1 // pred_check_branch
      %12 = sbr.rel (0) target = $region9
    $region8: #{encoder_cnn_forward.3} parent=1 // pred_region
      _
    $region9: #{encoder_cnn_forward.3} parent=1 // pred_fallthru
      _
    // Predicated region
    $region10: #{encoder_cnn_forward.3} parent=1 // pred_check
      _
    $region11: #{encoder_cnn_forward.3} parent=1 // pred_check_branch
      %14 = sbr.rel (0) target = $region13
    $region12: #{encoder_cnn_forward.3} parent=1 // pred_region
      _
    $region13: #{encoder_cnn_forward.3} parent=1 // pred_fallthru
      _
    %v15 = vld [vmem:[%s0] sm:$0xff]
    %v16 = vld [vmem:[%s0 + $0x8] sm:$0xff]
    %v17 = vadd.f32 %v15, %v16
    %v18 = vrot.slane %v17, 4
    %v19 = vadd.f32 %v17, %v18
    %v20 = vrot.slane %v19, 2
    %v21 = vadd.f32 %v19, %v20
    %v22 = vrot.slane %v21, 1
    %v23 = vadd.f32 %v21, %v22
    %v24 = vrcp.pop 16.0
    %v25 = vmul.f32 %v23, %v24
    %v26 = vsub.f32 %v15, %v25
    %v27 = vsub.f32 %v16, %v25
    %v28 = vmul.f32 %v26, %v26
    %v29 = vmul.f32 %v27, %v27
    %v30 = vadd.f32 %v28, %v29
    %v31 = vrot.slane %v30, 4
    %v32 = vadd.f32 %v30, %v31
    %v33 = vrot.slane %v32, 2
    %v34 = vadd.f32 %v32, %v33
    %v35 = vrot.slane %v34, 1
    %v36 = vadd.f32 %v34, %v35
    %v37 = vmul.f32 %v36, %v24
    %v38 = vld [vmem:[%s1] sm:$0x1]
    %v39 = vadd.f32 %v37, 1e-05
    %v40 = vrsqrt.pop %v39
    %v41 = vmul.f32 %v26, %v40
    %v42 = vmul.f32 %v27, %v40
    %v44 = vlaneseq
    %v45 = vshrl.u32 %v44, 7
    %v46 = vsub.s32 0, %v45
    %v47 = vrot.slane %v38, %v46
    %v49 = vmul.f32 %v47, %v41
    %v50 = vmul.f32 %v47, %v42
    %v51 = vld [vmem:[%s2] sm:$0x1]
    %v53 = vlaneseq
    %v54 = vshrl.u32 %v53, 7
    %v55 = vsub.s32 0, %v54
    %v56 = vrot.slane %v51, %v55
    %v58 = vadd.f32 %v49, %v56
    %v59 = vadd.f32 %v50, %v56
    %60 = vst [vmem:[#allocation2] sm:$0xff] %v58
    %61 = vst [vmem:[#allocation2 + $0x8] sm:$0xff] %v59
    // Predicated region
    $region14: #{encoder_cnn_forward.3} parent=1 // pred_check
      _
    $region15: #{encoder_cnn_forward.3} parent=1 // pred_check_branch
      %63 = sbr.rel (0) target = $region17
    $region16: #{encoder_cnn_forward.3} parent=1 // pred_region
      %s65 = ssub.s32 256, 256
      %66 = vsyncadd [#allocation3], %s65
      %s67 = sshll.u32 [#allocation2], 4
      %s68 = int_to_ptr.vmem [resolvable:$true] %s67
      %73 = dma.vmem_to_hbm [thread:$0]  %s68, 256, %s3, [#allocation3], 128, 128, 8
    $region17: #{encoder_cnn_forward.3} parent=1 // pred_fallthru
      _
    // Predicated region
    $region18: #{encoder_cnn_forward.3} parent=1 // pred_check
      _
    $region19: #{encoder_cnn_forward.3} parent=1 // pred_check_branch
      %75 = sbr.rel (0) target = $region21
    $region20: #{encoder_cnn_forward.3} parent=1 // pred_region
      %76 = dma.done [#allocation3], 256
    $region21: #{encoder_cnn_forward.3} parent=1 // pred_fallthru
      _
    %77 = vsyncpa [#allocation3], 1

// kernel: encoder_cnn_forward.2
$region0: #{encoder_cnn_forward.2}
  #allocation0 [shape = 'u32[]', space=smem, size = 0x4, offset = 0x4, fixed_abs, tag = 'smem constant byte address 0x4 - core index']
  #allocation1 [shape = 'u32[144,128]{1,0:T(1,128)}', space=vmem, size = 0x12000, scoped, tag = 'internal scratch']
  %s0 = inlined_call_operand.vmem [shape: f32[16,16,128], index: 0, kind: input, shape index: {}]
  %s1 = inlined_call_operand.vmem [shape: f32[8,16,128], index: 1, kind: input, shape index: {}]
  %s2 = inlined_call_operand.vmem [shape: f32[1,128], index: 2, kind: input, shape index: {}]
  %s3 = inlined_call_operand.vmem [shape: f32[16,128], index: 3, kind: output, shape index: {}]
  %s4 = sld [smem:[#allocation0]]
  $region45: #{encoder_cnn_forward.2} parent=0
    _
  %s6 = ssub.s32 1, %s4
  %s7 = scalar_select 0, %s6, %s4
  loop: start=0, step=1, limit=4
  $region2: #{encoder_cnn_forward.2} parent=0 // loop_pre_header
    _
  $region3: #{encoder_cnn_forward.2} parent=0 // loop_header
    %s9 = sphi 0, %s13
    %p10 = scmp.ge.s32.totalorder %s9, 4
    %s19 = sphi 0, %s21
    %s22 = sphi 0, %s19
    %s23 = sphi 0, %s22
    %s39 = sphi 0, %s23
    %s43 = sphi 0, %s43
    %s45 = sphi 0, %s43
    %s46 = sphi 0, %s45
    %s60 = sphi 0, %s46
    %s64 = sphi 0, %s64
    %s66 = sphi 0, %s64
    %s67 = sphi 0, %s66
    %s81 = sphi 0, %s67
    %s87 = sphi 0, %s89
    %s90 = sphi 0, %s87
    %s91 = sphi 0, %s90
    %s107 = sphi 0, %s91
  $region4: #{encoder_cnn_forward.2} parent=0 // loop_header_branch
    %12 = sbr.rel (%p10) target = $region8
  $region5: #{encoder_cnn_forward.2} parent=0 // loop_body
    %s14 = ssub.s32 %s9, 1
    %s15 = ssub.s32 %s9, 2
    %s16 = sadd.s32 %s9, 1
    %s17 = ssub.s32 %s9, %s16
    %p18 = scmp.eq.s32.totalorder %s17, 0
    %s20 = sadd.s32 %s19, 1
    %s21 = scalar_select %p18, %s19, %s20
    %p24 = pneg %p18
    %p25 = scmp.eq.s32.totalorder %s9, 1
    %p26 = por %p24, %p25
    %p27 = scmp.ne.s32.totalorder %s19, %s22
    %p28 = scmp.eq.s32.totalorder %s9, 0
    %p29 = por %p27, %p28
    %p30 = scmp.ne.s32.totalorder %s19, %s22
    %p31 = scmp.eq.s32.totalorder %s14, 1
    %p32 = por %p30, %p31
    %p33 = scmp.ne.s32.totalorder %s22, %s23
    %p34 = scmp.eq.s32.totalorder %s14, 0
    %p35 = por %p33, %p34
    %p36 = scmp.ne.s32.totalorder %s22, %s23
    %p37 = scmp.eq.s32.totalorder %s15, 1
    %p38 = por %p36, %p37
    %p40 = scmp.ne.s32.totalorder %s23, %s39
    %p41 = scmp.eq.s32.totalorder %s15, 0
    %p42 = por %p40, %p41
    %s44 = sadd.s32 %s43, 1
    %p47 = scmp.eq.s32.totalorder %s9, 1
    %p48 = scmp.ne.s32.totalorder %s43, %s45
    %p49 = scmp.eq.s32.totalorder %s9, 0
    %p50 = por %p48, %p49
    %p51 = scmp.ne.s32.totalorder %s43, %s45
    %p52 = scmp.eq.s32.totalorder %s14, 1
    %p53 = por %p51, %p52
    %p54 = scmp.ne.s32.totalorder %s45, %s46
    %p55 = scmp.eq.s32.totalorder %s14, 0
    %p56 = por %p54, %p55
    %p57 = scmp.ne.s32.totalorder %s45, %s46
    %p58 = scmp.eq.s32.totalorder %s15, 1
    %p59 = por %p57, %p58
    %p61 = scmp.ne.s32.totalorder %s46, %s60
    %p62 = scmp.eq.s32.totalorder %s15, 0
    %p63 = por %p61, %p62
    %s65 = sadd.s32 %s64, 1
    %p68 = scmp.eq.s32.totalorder %s9, 1
    %p69 = scmp.ne.s32.totalorder %s64, %s66
    %p70 = scmp.eq.s32.totalorder %s9, 0
    %p71 = por %p69, %p70
    %p72 = scmp.ne.s32.totalorder %s64, %s66
    %p73 = scmp.eq.s32.totalorder %s14, 1
    %p74 = por %p72, %p73
    %p75 = scmp.ne.s32.totalorder %s66, %s67
    %p76 = scmp.eq.s32.totalorder %s14, 0
    %p77 = por %p75, %p76
    %p78 = scmp.ne.s32.totalorder %s66, %s67
    %p79 = scmp.eq.s32.totalorder %s15, 1
    %p80 = por %p78, %p79
    %p82 = scmp.ne.s32.totalorder %s67, %s81
    %p83 = scmp.eq.s32.totalorder %s15, 0
    %p84 = por %p82, %p83
    %s85 = ssub.s32 %s9, %s16
    %p86 = scmp.eq.s32.totalorder %s85, 0
    %s88 = sadd.s32 %s87, 1
    %s89 = scalar_select %p86, %s87, %s88
    %p92 = pneg %p86
    %p93 = scmp.eq.s32.totalorder %s9, 1
    %p94 = por %p92, %p93
    %p95 = scmp.ne.s32.totalorder %s87, %s90
    %p96 = scmp.eq.s32.totalorder %s9, 0
    %p97 = por %p95, %p96
    %p98 = scmp.ne.s32.totalorder %s87, %s90
    %p99 = scmp.eq.s32.totalorder %s14, 1
    %p100 = por %p98, %p99
    %p101 = scmp.ne.s32.totalorder %s90, %s91
    %p102 = scmp.eq.s32.totalorder %s14, 0
    %p103 = por %p101, %p102
    %p104 = scmp.ne.s32.totalorder %s90, %s91
    %p105 = scmp.eq.s32.totalorder %s15, 1
    %p106 = por %p104, %p105
    %p108 = scmp.ne.s32.totalorder %s91, %s107
    %p109 = scmp.eq.s32.totalorder %s15, 0
    %p110 = por %p108, %p109
    %p111 = scmp.le.s32.totalorder 1, %s9
    %p112 = scmp.lt.s32.totalorder %s9, 3
    %p113 = pnand %p111, %p112
    %p114 = pneg %p113
    // Predicated region
    $region9: #{encoder_cnn_forward.2} parent=5 // pred_check
      _
    $region10: #{encoder_cnn_forward.2} parent=5 // pred_check_branch
      %116 = sbr.rel (%p113) target = $region12
    $region11: #{encoder_cnn_forward.2} parent=5 // pred_region
      %s117 = ssub.s32 %s9, 1
      // Predicated region
      $region13: #{encoder_cnn_forward.2} parent=11 // pred_check
        %p118 = pneg %p56
      $region14: #{encoder_cnn_forward.2} parent=11 // pred_check_branch
        %120 = sbr.rel (%p118) target = $region16
      $region15: #{encoder_cnn_forward.2} parent=11 // pred_region
        _
      $region16: #{encoder_cnn_forward.2} parent=11 // pred_fallthru
        _
      // Predicated region
      $region17: #{encoder_cnn_forward.2} parent=11 // pred_check
        %p121 = pneg %p77
      $region18: #{encoder_cnn_forward.2} parent=11 // pred_check_branch
        %123 = sbr.rel (%p121) target = $region20
      $region19: #{encoder_cnn_forward.2} parent=11 // pred_region
        _
      $region20: #{encoder_cnn_forward.2} parent=11 // pred_fallthru
        _
    $region12: #{encoder_cnn_forward.2} parent=5 // pred_fallthru
      _
    %p124 = scmp.lt.s32.totalorder %s9, 2
    // Predicated region
    $region21: #{encoder_cnn_forward.2} parent=5 // pred_check
      %p125 = pneg %p124
    $region22: #{encoder_cnn_forward.2} parent=5 // pred_check_branch
      %127 = sbr.rel (%p125) target = $region24
    $region23: #{encoder_cnn_forward.2} parent=5 // pred_region
      // Predicated region
      $region25: #{encoder_cnn_forward.2} parent=23 // pred_check
        %p128 = pneg %p29
      $region26: #{encoder_cnn_forward.2} parent=23 // pred_check_branch
        %130 = sbr.rel (%p128) target = $region28
      $region27: #{encoder_cnn_forward.2} parent=23 // pred_region
        %s131 = smul.u32 8, %s9
        %p132 = scmp.lt.s32.totalorder %s131, 15
        %s133 = scalar_select %p132, %s131, 15
        %s134 = smul.addr %s133, 2
        %s135 = smul.addr %s134, 8
        %s136 = scalar_lea.vmem %s0, %s135
        %s137 = smul.u32 8, %s9
      $region28: #{encoder_cnn_forward.2} parent=23 // pred_fallthru
        _
    $region24: #{encoder_cnn_forward.2} parent=5 // pred_fallthru
      _
    %p138 = scmp.le.s32.totalorder 1, %s9
    %p139 = scmp.lt.s32.totalorder %s9, 3
    %p140 = pnand %p138, %p139
    %p141 = pneg %p140
    // Predicated region
    $region29: #{encoder_cnn_forward.2} parent=5 // pred_check
      _
    $region30: #{encoder_cnn_forward.2} parent=5 // pred_check_branch
      %143 = sbr.rel (%p140) target = $region32
    $region31: #{encoder_cnn_forward.2} parent=5 // pred_region
      %s144 = ssub.s32 %s9, 1
      %s145 = smul.u32 8, %s14
      %p146 = scmp.lt.s32.totalorder %s145, 15
      %s147 = scalar_select %p146, %s145, 15
      %s148 = smul.addr %s147, 2
      %s149 = smul.addr %s148, 8
      %s150 = scalar_lea.vmem %s0, %s149
      %p151 = pneg %p35
      %p152 = pneg %p32
      %p153 = pneg %p56
      %p154 = pneg %p53
      %p155 = pneg %p77
      %p156 = pneg %p74
      %p157 = pneg %p103
      %p158 = pneg %p100
      %p159 = scmp.lt.s32.totalorder %s14, 1
      %s160 = scalar_select %p159, %s14, 1
      %s161 = smul.addr %s160, 8
      %s162 = scalar_lea.vmem %s3, %s161
      %s163 = smul.u32 8, %s14
      %p164 = scmp.lt.s32.totalorder %s163, 15
      %s165 = scalar_select %p164, %s163, 15
      %s166 = smul.addr %s165, 2
      %s167 = smul.addr %s166, 8
      %s168 = scalar_lea.vmem %s0, %s167
      %s169 = smul.u32 8, %s14
      %p170 = scmp.lt.s32.totalorder %s14, 1
      %s171 = scalar_select %p170, %s14, 1
      %s172 = smul.addr %s171, 8
      %s173 = scalar_lea.vmem %s3, %s172
      %v174 = vld [vmem:[%s168] sm:$0xff]
      %v175 = vld [vmem:[%s168 + $0x8] sm:$0xff]
      %v176 = vld [vmem:[%s168 + $0x10] sm:$0xff]
      %v177 = vld [vmem:[%s168 + $0x18] sm:$0xff]
      %v178 = vld [vmem:[%s168 + $0x20] sm:$0xff]
      %v179 = vld [vmem:[%s168 + $0x28] sm:$0xff]
      %v180 = vld [vmem:[%s168 + $0x30] sm:$0xff]
      %v181 = vld [vmem:[%s168 + $0x38] sm:$0xff]
      %v182 = vld [vmem:[%s168 + $0x40] sm:$0xff]
      %v183 = vld [vmem:[%s168 + $0x48] sm:$0xff]
      %v184 = vld [vmem:[%s168 + $0x50] sm:$0xff]
      %v185 = vld [vmem:[%s168 + $0x58] sm:$0xff]
      %v186 = vld [vmem:[%s168 + $0x60] sm:$0xff]
      %v187 = vld [vmem:[%s168 + $0x68] sm:$0xff]
      %v188 = vld [vmem:[%s168 + $0x70] sm:$0xff]
      %v189 = vld [vmem:[%s168 + $0x78] sm:$0xff]
      %v190 = vlaneseq
      %v191 = vand.u32 %v190, 127
      %vm192 = vcmp.ge.s32.totalorder %v191, 0
      %vm193 = vcmp.lt.s32.totalorder %v191, 16
      %vm194 = vmand %vm192, %vm193
      %v195 = vsel %vm194, 1, 0
      %vm196 = vcmp.eq.s32.totalorder %v195, 1
      %v197 = vsel %vm196, %v174, 0.0
      %v198 = vsel %vm196, %v175, 0.0
      %v199 = vsel %vm196, %v176, 0.0
      %v200 = vsel %vm196, %v177, 0.0
      %v201 = vsel %vm196, %v178, 0.0
      %v202 = vsel %vm196, %v179, 0.0
      %v203 = vsel %vm196, %v180, 0.0
      %v204 = vsel %vm196, %v181, 0.0
      %v205 = vsel %vm196, %v182, 0.0
      %v206 = vsel %vm196, %v183, 0.0
      %v207 = vsel %vm196, %v184, 0.0
      %v208 = vsel %vm196, %v185, 0.0
      %v209 = vsel %vm196, %v186, 0.0
      %v210 = vsel %vm196, %v187, 0.0
      %v211 = vsel %vm196, %v188, 0.0
      %v212 = vsel %vm196, %v189, 0.0
      %213 = vadd.xlane.f32.xlu0 %v197
      %v214 = vpop.xlane.xlu0 %213
      %215 = vadd.xlane.f32.xlu0 %v198
      %v216 = vpop.xlane.xlu0 %215
      %217 = vadd.xlane.f32.xlu0 %v199
      %v218 = vpop.xlane.xlu0 %217
      %219 = vadd.xlane.f32.xlu0 %v200
      %v220 = vpop.xlane.xlu0 %219
      %221 = vadd.xlane.f32.xlu0 %v201
      %v222 = vpop.xlane.xlu0 %221
      %223 = vadd.xlane.f32.xlu0 %v202
      %v224 = vpop.xlane.xlu0 %223
      %225 = vadd.xlane.f32.xlu0 %v203
      %v226 = vpop.xlane.xlu0 %225
      %227 = vadd.xlane.f32.xlu0 %v204
      %v228 = vpop.xlane.xlu0 %227
      %229 = vadd.xlane.f32.xlu0 %v205
      %v230 = vpop.xlane.xlu0 %229
      %231 = vadd.xlane.f32.xlu0 %v206
      %v232 = vpop.xlane.xlu0 %231
      %233 = vadd.xlane.f32.xlu0 %v207
      %v234 = vpop.xlane.xlu0 %233
      %235 = vadd.xlane.f32.xlu0 %v208
      %v236 = vpop.xlane.xlu0 %235
      %237 = vadd.xlane.f32.xlu0 %v209
      %v238 = vpop.xlane.xlu0 %237
      %239 = vadd.xlane.f32.xlu0 %v210
      %v240 = vpop.xlane.xlu0 %239
      %241 = vadd.xlane.f32.xlu0 %v211
      %v242 = vpop.xlane.xlu0 %241
      %243 = vadd.xlane.f32.xlu0 %v212
      %v244 = vpop.xlane.xlu0 %243
      %v245 = vld [vmem:[%s1] sm:$0xff]
      %v246 = vld [vmem:[%s1 + $0x8] sm:$0xff]
      %vm247 = vcmp.ge.s32.totalorder %v191, 16
      %vm248 = vcmp.lt.s32.totalorder %v191, 32
      %vm249 = vmand %vm247, %vm248
      %v250 = vsel %vm249, 1, 0
      %vm251 = vcmp.eq.s32.totalorder %v250, 1
      %v252 = vsel %vm251, %v174, 0.0
      %v253 = vsel %vm251, %v175, 0.0
      %v254 = vsel %vm251, %v176, 0.0
      %v255 = vsel %vm251, %v177, 0.0
      %v256 = vsel %vm251, %v178, 0.0
      %v257 = vsel %vm251, %v179, 0.0
      %v258 = vsel %vm251, %v180, 0.0
      %v259 = vsel %vm251, %v181, 0.0
      %v260 = vsel %vm251, %v182, 0.0
      %v261 = vsel %vm251, %v183, 0.0
      %v262 = vsel %vm251, %v184, 0.0
      %v263 = vsel %vm251, %v185, 0.0
      %v264 = vsel %vm251, %v186, 0.0
      %v265 = vsel %vm251, %v187, 0.0
      %v266 = vsel %vm251, %v188, 0.0
      %v267 = vsel %vm251, %v189, 0.0
      %268 = vadd.xlane.f32.xlu0 %v252
      %v269 = vpop.xlane.xlu0 %268
      %270 = vadd.xlane.f32.xlu0 %v253
      %v271 = vpop.xlane.xlu0 %270
      %272 = vadd.xlane.f32.xlu0 %v254
      %v273 = vpop.xlane.xlu0 %272
      %274 = vadd.xlane.f32.xlu0 %v255
      %v275 = vpop.xlane.xlu0 %274
      %276 = vadd.xlane.f32.xlu0 %v256
      %v277 = vpop.xlane.xlu0 %276
      %278 = vadd.xlane.f32.xlu0 %v257
      %v279 = vpop.xlane.xlu0 %278
      %280 = vadd.xlane.f32.xlu0 %v258
      %v281 = vpop.xlane.xlu0 %280
      %282 = vadd.xlane.f32.xlu0 %v259
      %v283 = vpop.xlane.xlu0 %282
      %284 = vadd.xlane.f32.xlu0 %v260
      %v285 = vpop.xlane.xlu0 %284
      %286 = vadd.xlane.f32.xlu0 %v261
      %v287 = vpop.xlane.xlu0 %286
      %288 = vadd.xlane.f32.xlu0 %v262
      %v289 = vpop.xlane.xlu0 %288
      %290 = vadd.xlane.f32.xlu0 %v263
      %v291 = vpop.xlane.xlu0 %290
      %292 = vadd.xlane.f32.xlu0 %v264
      %v293 = vpop.xlane.xlu0 %292
      %294 = vadd.xlane.f32.xlu0 %v265
      %v295 = vpop.xlane.xlu0 %294
      %296 = vadd.xlane.f32.xlu0 %v266
      %v297 = vpop.xlane.xlu0 %296
      %298 = vadd.xlane.f32.xlu0 %v267
      %v299 = vpop.xlane.xlu0 %298
      %s300 = scalar_lea.vmem %s1, 16
      %v301 = vld [vmem:[%s300] sm:$0xff]
      %v302 = vld [vmem:[%s300 + $0x8] sm:$0xff]
      %v319 = vlaneseq
      %v320 = vshrl.u32 %v319, 7
      %v321 = vsub.s32 %v191, %v320
      %v322 = vrot.slane %v269, %v321
      %v323 = vadd.s32 %v191, 4294967288
      %v324 = vlaneseq
      %v325 = vshrl.u32 %v324, 7
      %v326 = vsub.s32 %v323, %v325
      %v327 = vrot.slane %v271, %v326
      %vm328 = vcmask 130112
      %v329 = vsel %vm328, %v327, %v322
      %v330 = vlaneseq
      %v331 = vshrl.u32 %v330, 7
      %v332 = vsub.s32 %v191, %v331
      %v333 = vrot.slane %v273, %v332
      %v334 = vlaneseq
      %v335 = vshrl.u32 %v334, 7
      %v336 = vsub.s32 %v323, %v335
      %v337 = vrot.slane %v275, %v336
      %v338 = vsel %vm328, %v337, %v333
      %v339 = vlaneseq
      %v340 = vshrl.u32 %v339, 7
      %v341 = vsub.s32 %v191, %v340
      %v342 = vrot.slane %v277, %v341
      %v343 = vlaneseq
      %v344 = vshrl.u32 %v343, 7
      %v345 = vsub.s32 %v323, %v344
      %v346 = vrot.slane %v279, %v345
      %v347 = vsel %vm328, %v346, %v342
      %v348 = vlaneseq
      %v349 = vshrl.u32 %v348, 7
      %v350 = vsub.s32 %v191, %v349
      %v351 = vrot.slane %v281, %v350
      %v352 = vlaneseq
      %v353 = vshrl.u32 %v352, 7
      %v354 = vsub.s32 %v323, %v353
      %v355 = vrot.slane %v283, %v354
      %v356 = vsel %vm328, %v355, %v351
      %v357 = vlaneseq
      %v358 = vshrl.u32 %v357, 7
      %v359 = vsub.s32 %v191, %v358
      %v360 = vrot.slane %v285, %v359
      %v361 = vlaneseq
      %v362 = vshrl.u32 %v361, 7
      %v363 = vsub.s32 %v323, %v362
      %v364 = vrot.slane %v287, %v363
      %v365 = vsel %vm328, %v364, %v360
      %v366 = vlaneseq
      %v367 = vshrl.u32 %v366, 7
      %v368 = vsub.s32 %v191, %v367
      %v369 = vrot.slane %v289, %v368
      %v370 = vlaneseq
      %v371 = vshrl.u32 %v370, 7
      %v372 = vsub.s32 %v323, %v371
      %v373 = vrot.slane %v291, %v372
      %v374 = vsel %vm328, %v373, %v369
      %v375 = vlaneseq
      %v376 = vshrl.u32 %v375, 7
      %v377 = vsub.s32 %v191, %v376
      %v378 = vrot.slane %v293, %v377
      %v379 = vlaneseq
      %v380 = vshrl.u32 %v379, 7
      %v381 = vsub.s32 %v323, %v380
      %v382 = vrot.slane %v295, %v381
      %v383 = vsel %vm328, %v382, %v378
      %v384 = vlaneseq
      %v385 = vshrl.u32 %v384, 7
      %v386 = vsub.s32 %v191, %v385
      %v387 = vrot.slane %v297, %v386
      %v388 = vlaneseq
      %v389 = vshrl.u32 %v388, 7
      %v390 = vsub.s32 %v323, %v389
      %v391 = vrot.slane %v299, %v390
      %v392 = vsel %vm328, %v391, %v387
      %vm393 = vcmask 1041409
      %v394 = vsel %vm393, %v338, %v329
      %vm395 = vcmask 1042434
      %v396 = vsel %vm395, %v347, %v394
      %vm397 = vcmask 1043459
      %v398 = vsel %vm397, %v356, %v396
      %vm399 = vcmask 1044484
      %v400 = vsel %vm399, %v365, %v398
      %vm401 = vcmask 1045509
      %v402 = vsel %vm401, %v374, %v400
      %vm403 = vcmask 1046534
      %v404 = vsel %vm403, %v383, %v402
      %vm405 = vcmask 1047559
      %v406 = vsel %vm405, %v392, %v404
      %vm407 = vcmask 130048
      %v408 = vsel %vm407, %v406, 0
      %410 = vmatprep.subr.mxu0 0.0
      %411 = vmatpush1.msra.mxu0 %v301
      %412 = vmatprep.subr.mxu0 0.0
      %413 = vmatpush1.msra.mxu0 %v302
      %414 = vmatprep.subr.mxu0 0.0
      %415 = vmatpush1.msra.mxu0 0.0
      %416 = vmatprep.subr.mxu0 0.0
      %417 = vmatpush1.msra.mxu0 0.0
      %418 = vmatprep.subr.mxu0 0.0
      %419 = vmatpush1.msra.mxu0 0.0
      %420 = vmatprep.subr.mxu0 0.0
      %421 = vmatpush1.msra.mxu0 0.0
      %422 = vmatprep.subr.mxu0 0.0
      %423 = vmatpush1.msra.mxu0 0.0
      %424 = vmatprep.subr.mxu0 0.0
      %425 = vmatpush1.msra.mxu0 0.0
      %426 = vmatprep.subr.mxu0 0.0
      %427 = vmatpush1.msra.mxu0 0.0
      %428 = vmatprep.subr.mxu0 0.0
      %429 = vmatpush1.msra.mxu0 0.0
      %430 = vmatprep.subr.mxu0 0.0
      %431 = vmatpush1.msra.mxu0 0.0
      %432 = vmatprep.subr.mxu0 0.0
      %433 = vmatpush1.msra.mxu0 0.0
      %434 = vmatprep.subr.mxu0 0.0
      %435 = vmatpush1.msra.mxu0 0.0
      %436 = vmatprep.subr.mxu0 0.0
      %437 = vmatpush1.msra.mxu0 0.0
      %438 = vmatprep.subr.mxu0 0.0
      %439 = vmatpush1.msra.mxu0 0.0
      %440 = vmatprep.subr.mxu0 0.0
      %441 = vmatpush1.msra.mxu0 0.0
      %442 = vmatprep.subr.mxu0 0.0
      %443 = vmatpush1.msra.mxu0 0.0
      %444 = vmatprep.subr.mxu0 0.0
      %445 = vmatpush1.msra.mxu0 0.0
      %446 = vmatprep.subr.mxu0 0.0
      %447 = vmatpush1.msra.mxu0 0.0
      %448 = vmatprep.subr.mxu0 0.0
      %449 = vmatpush1.msra.mxu0 0.0
      %450 = vmatprep.subr.mxu0 0.0
      %451 = vmatpush1.msra.mxu0 0.0
      %452 = vmatprep.subr.mxu0 0.0
      %453 = vmatpush1.msra.mxu0 0.0
      %454 = vmatprep.subr.mxu0 0.0
      %455 = vmatpush1.msra.mxu0 0.0
      %456 = vmatprep.subr.mxu0 0.0
      %457 = vmatpush1.msra.mxu0 0.0
      %458 = vmatprep.subr.mxu0 0.0
      %459 = vmatpush1.msra.mxu0 0.0
      %460 = vmatprep.subr.mxu0 0.0
      %461 = vmatpush1.msra.mxu0 0.0
      %462 = vmatprep.subr.mxu0 0.0
      %463 = vmatpush1.msra.mxu0 0.0
      %464 = vmatprep.subr.mxu0 0.0
      %465 = vmatpush1.msra.mxu0 0.0
      %466 = vmatprep.subr.mxu0 0.0
      %467 = vmatpush1.msra.mxu0 0.0
      %468 = vmatprep.subr.mxu0 0.0
      %469 = vmatpush1.msra.mxu0 0.0
      %470 = vmatprep.subr.mxu0 0.0
      %471 = vmatpush1.msra.mxu0 0.0
      %472 = vmatprep.subr.mxu0 0.0
      %473 = vmatpush1.msra.mxu0 0.0
      %474 = vmatprep.mubr.f32.mxu0 0.0
      %475 = vmatmul.mubr.f32.gmra.mrb[0].mxu0 %v408
      %v476 = vpop.f32.mrb[0].mxu0
      %v477 = vadd.f32 0.0, %v476
      %v478 = vpop.f32.mrb[0].mxu0
      %479 = vdwg.mxu0
      %v496 = vlaneseq
      %v497 = vshrl.u32 %v496, 7
      %v498 = vsub.s32 %v191, %v497
      %v499 = vrot.slane %v214, %v498
      %v500 = vlaneseq
      %v501 = vshrl.u32 %v500, 7
      %v502 = vsub.s32 %v323, %v501
      %v503 = vrot.slane %v216, %v502
      %v504 = vsel %vm328, %v503, %v499
      %v505 = vlaneseq
      %v506 = vshrl.u32 %v505, 7
      %v507 = vsub.s32 %v191, %v506
      %v508 = vrot.slane %v218, %v507
      %v509 = vlaneseq
      %v510 = vshrl.u32 %v509, 7
      %v511 = vsub.s32 %v323, %v510
      %v512 = vrot.slane %v220, %v511
      %v513 = vsel %vm328, %v512, %v508
      %v514 = vlaneseq
      %v515 = vshrl.u32 %v514, 7
      %v516 = vsub.s32 %v191, %v515
      %v517 = vrot.slane %v222, %v516
      %v518 = vlaneseq
      %v519 = vshrl.u32 %v518, 7
      %v520 = vsub.s32 %v323, %v519
      %v521 = vrot.slane %v224, %v520
      %v522 = vsel %vm328, %v521, %v517
      %v523 = vlaneseq
      %v524 = vshrl.u32 %v523, 7
      %v525 = vsub.s32 %v191, %v524
      %v526 = vrot.slane %v226, %v525
      %v527 = vlaneseq
      %v528 = vshrl.u32 %v527, 7
      %v529 = vsub.s32 %v323, %v528
      %v530 = vrot.slane %v228, %v529
      %v531 = vsel %vm328, %v530, %v526
      %v532 = vlaneseq
      %v533 = vshrl.u32 %v532, 7
      %v534 = vsub.s32 %v191, %v533
      %v535 = vrot.slane %v230, %v534
      %v536 = vlaneseq
      %v537 = vshrl.u32 %v536, 7
      %v538 = vsub.s32 %v323, %v537
      %v539 = vrot.slane %v232, %v538
      %v540 = vsel %vm328, %v539, %v535
      %v541 = vlaneseq
      %v542 = vshrl.u32 %v541, 7
      %v543 = vsub.s32 %v191, %v542
      %v544 = vrot.slane %v234, %v543
      %v545 = vlaneseq
      %v546 = vshrl.u32 %v545, 7
      %v547 = vsub.s32 %v323, %v546
      %v548 = vrot.slane %v236, %v547
      %v549 = vsel %vm328, %v548, %v544
      %v550 = vlaneseq
      %v551 = vshrl.u32 %v550, 7
      %v552 = vsub.s32 %v191, %v551
      %v553 = vrot.slane %v238, %v552
      %v554 = vlaneseq
      %v555 = vshrl.u32 %v554, 7
      %v556 = vsub.s32 %v323, %v555
      %v557 = vrot.slane %v240, %v556
      %v558 = vsel %vm328, %v557, %v553
      %v559 = vlaneseq
      %v560 = vshrl.u32 %v559, 7
      %v561 = vsub.s32 %v191, %v560
      %v562 = vrot.slane %v242, %v561
      %v563 = vlaneseq
      %v564 = vshrl.u32 %v563, 7
      %v565 = vsub.s32 %v323, %v564
      %v566 = vrot.slane %v244, %v565
      %v567 = vsel %vm328, %v566, %v562
      %v568 = vsel %vm393, %v513, %v504
      %v569 = vsel %vm395, %v522, %v568
      %v570 = vsel %vm397, %v531, %v569
      %v571 = vsel %vm399, %v540, %v570
      %v572 = vsel %vm401, %v549, %v571
      %v573 = vsel %vm403, %v558, %v572
      %v574 = vsel %vm405, %v567, %v573
      %v575 = vsel %vm407, %v574, 0
      %577 = vmatprep.subr.mxu0 0.0
      %578 = vmatpush1.msra.mxu0 %v245
      %579 = vmatprep.subr.mxu0 0.0
      %580 = vmatpush1.msra.mxu0 %v246
      %581 = vmatprep.subr.mxu0 0.0
      %582 = vmatpush1.msra.mxu0 0.0
      %583 = vmatprep.subr.mxu0 0.0
      %584 = vmatpush1.msra.mxu0 0.0
      %585 = vmatprep.subr.mxu0 0.0
      %586 = vmatpush1.msra.mxu0 0.0
      %587 = vmatprep.subr.mxu0 0.0
      %588 = vmatpush1.msra.mxu0 0.0
      %589 = vmatprep.subr.mxu0 0.0
      %590 = vmatpush1.msra.mxu0 0.0
      %591 = vmatprep.subr.mxu0 0.0
      %592 = vmatpush1.msra.mxu0 0.0
      %593 = vmatprep.subr.mxu0 0.0
      %594 = vmatpush1.msra.mxu0 0.0
      %595 = vmatprep.subr.mxu0 0.0
      %596 = vmatpush1.msra.mxu0 0.0
      %597 = vmatprep.subr.mxu0 0.0
      %598 = vmatpush1.msra.mxu0 0.0
      %599 = vmatprep.subr.mxu0 0.0
      %600 = vmatpush1.msra.mxu0 0.0
      %601 = vmatprep.subr.mxu0 0.0
      %602 = vmatpush1.msra.mxu0 0.0
      %603 = vmatprep.subr.mxu0 0.0
      %604 = vmatpush1.msra.mxu0 0.0
      %605 = vmatprep.subr.mxu0 0.0
      %606 = vmatpush1.msra.mxu0 0.0
      %607 = vmatprep.subr.mxu0 0.0
      %608 = vmatpush1.msra.mxu0 0.0
      %609 = vmatprep.subr.mxu0 0.0
      %610 = vmatpush1.msra.mxu0 0.0
      %611 = vmatprep.subr.mxu0 0.0
      %612 = vmatpush1.msra.mxu0 0.0
      %613 = vmatprep.subr.mxu0 0.0
      %614 = vmatpush1.msra.mxu0 0.0
      %615 = vmatprep.subr.mxu0 0.0
      %616 = vmatpush1.msra.mxu0 0.0
      %617 = vmatprep.subr.mxu0 0.0
      %618 = vmatpush1.msra.mxu0 0.0
      %619 = vmatprep.subr.mxu0 0.0
      %620 = vmatpush1.msra.mxu0 0.0
      %621 = vmatprep.subr.mxu0 0.0
      %622 = vmatpush1.msra.mxu0 0.0
      %623 = vmatprep.subr.mxu0 0.0
      %624 = vmatpush1.msra.mxu0 0.0
      %625 = vmatprep.subr.mxu0 0.0
      %626 = vmatpush1.msra.mxu0 0.0
      %627 = vmatprep.subr.mxu0 0.0
      %628 = vmatpush1.msra.mxu0 0.0
      %629 = vmatprep.subr.mxu0 0.0
      %630 = vmatpush1.msra.mxu0 0.0
      %631 = vmatprep.subr.mxu0 0.0
      %632 = vmatpush1.msra.mxu0 0.0
      %633 = vmatprep.subr.mxu0 0.0
      %634 = vmatpush1.msra.mxu0 0.0
      %635 = vmatprep.subr.mxu0 0.0
      %636 = vmatpush1.msra.mxu0 0.0
      %637 = vmatprep.subr.mxu0 0.0
      %638 = vmatpush1.msra.mxu0 0.0
      %639 = vmatprep.subr.mxu0 0.0
      %640 = vmatpush1.msra.mxu0 0.0
      %641 = vmatprep.mubr.f32.mxu0 0.0
      %642 = vmatmul.mubr.f32.gmra.mrb[0].mxu0 %v575
      %v643 = vpop.f32.mrb[0].mxu0
      %v644 = vadd.f32 %v477, %v643
      %v645 = vpop.f32.mrb[0].mxu0
      %646 = vdwg.mxu0
      %vm647 = vcmp.ge.s32.totalorder %v191, 32
      %vm648 = vcmp.lt.s32.totalorder %v191, 48
      %vm649 = vmand %vm647, %vm648
      %v650 = vsel %vm649, 1, 0
      %vm651 = vcmp.eq.s32.totalorder %v650, 1
      %v652 = vsel %vm651, %v174, 0.0
      %v653 = vsel %vm651, %v175, 0.0
      %v654 = vsel %vm651, %v176, 0.0
      %v655 = vsel %vm651, %v177, 0.0
      %v656 = vsel %vm651, %v178, 0.0
      %v657 = vsel %vm651, %v179, 0.0
      %v658 = vsel %vm651, %v180, 0.0
      %v659 = vsel %vm651, %v181, 0.0
      %v660 = vsel %vm651, %v182, 0.0
      %v661 = vsel %vm651, %v183, 0.0
      %v662 = vsel %vm651, %v184, 0.0
      %v663 = vsel %vm651, %v185, 0.0
      %v664 = vsel %vm651, %v186, 0.0
      %v665 = vsel %vm651, %v187, 0.0
      %v666 = vsel %vm651, %v188, 0.0
      %v667 = vsel %vm651, %v189, 0.0
      %668 = vadd.xlane.f32.xlu0 %v652
      %v669 = vpop.xlane.xlu0 %668
      %670 = vadd.xlane.f32.xlu0 %v653
      %v671 = vpop.xlane.xlu0 %670
      %672 = vadd.xlane.f32.xlu0 %v654
      %v673 = vpop.xlane.xlu0 %672
      %674 = vadd.xlane.f32.xlu0 %v655
      %v675 = vpop.xlane.xlu0 %674
      %676 = vadd.xlane.f32.xlu0 %v656
      %v677 = vpop.xlane.xlu0 %676
      %678 = vadd.xlane.f32.xlu0 %v657
      %v679 = vpop.xlane.xlu0 %678
      %680 = vadd.xlane.f32.xlu0 %v658
      %v681 = vpop.xlane.xlu0 %680
      %682 = vadd.xlane.f32.xlu0 %v659
      %v683 = vpop.xlane.xlu0 %682
      %684 = vadd.xlane.f32.xlu0 %v660
      %v685 = vpop.xlane.xlu0 %684
      %686 = vadd.xlane.f32.xlu0 %v661
      %v687 = vpop.xlane.xlu0 %686
      %688 = vadd.xlane.f32.xlu0 %v662
      %v689 = vpop.xlane.xlu0 %688
      %690 = vadd.xlane.f32.xlu0 %v663
      %v691 = vpop.xlane.xlu0 %690
      %692 = vadd.xlane.f32.xlu0 %v664
      %v693 = vpop.xlane.xlu0 %692
      %694 = vadd.xlane.f32.xlu0 %v665
      %v695 = vpop.xlane.xlu0 %694
      %696 = vadd.xlane.f32.xlu0 %v666
      %v697 = vpop.xlane.xlu0 %696
      %698 = vadd.xlane.f32.xlu0 %v667
      %v699 = vpop.xlane.xlu0 %698
      %s700 = scalar_lea.vmem %s1, 32
      %v701 = vld [vmem:[%s700] sm:$0xff]
      %v702 = vld [vmem:[%s700 + $0x8] sm:$0xff]
      %v719 = vlaneseq
      %v720 = vshrl.u32 %v719, 7
      %v721 = vsub.s32 %v191, %v720
      %v722 = vrot.slane %v669, %v721
      %v723 = vlaneseq
      %v724 = vshrl.u32 %v723, 7
      %v725 = vsub.s32 %v323, %v724
      %v726 = vrot.slane %v671, %v725
      %v727 = vsel %vm328, %v726, %v722
      %v728 = vlaneseq
      %v729 = vshrl.u32 %v728, 7
      %v730 = vsub.s32 %v191, %v729
      %v731 = vrot.slane %v673, %v730
      %v732 = vlaneseq
      %v733 = vshrl.u32 %v732, 7
      %v734 = vsub.s32 %v323, %v733
      %v735 = vrot.slane %v675, %v734
      %v736 = vsel %vm328, %v735, %v731
      %v737 = vlaneseq
      %v738 = vshrl.u32 %v737, 7
      %v739 = vsub.s32 %v191, %v738
      %v740 = vrot.slane %v677, %v739
      %v741 = vlaneseq
      %v742 = vshrl.u32 %v741, 7
      %v743 = vsub.s32 %v323, %v742
      %v744 = vrot.slane %v679, %v743
      %v745 = vsel %vm328, %v744, %v740
      %v746 = vlaneseq
      %v747 = vshrl.u32 %v746, 7
      %v748 = vsub.s32 %v191, %v747
      %v749 = vrot.slane %v681, %v748
      %v750 = vlaneseq
      %v751 = vshrl.u32 %v750, 7
      %v752 = vsub.s32 %v323, %v751
      %v753 = vrot.slane %v683, %v752
      %v754 = vsel %vm328, %v753, %v749
      %v755 = vlaneseq
      %v756 = vshrl.u32 %v755, 7
      %v757 = vsub.s32 %v191, %v756
      %v758 = vrot.slane %v685, %v757
      %v759 = vlaneseq
      %v760 = vshrl.u32 %v759, 7
      %v761 = vsub.s32 %v323, %v760
      %v762 = vrot.slane %v687, %v761
      %v763 = vsel %vm328, %v762, %v758
      %v764 = vlaneseq
      %v765 = vshrl.u32 %v764, 7
      %v766 = vsub.s32 %v191, %v765
      %v767 = vrot.slane %v689, %v766
      %v768 = vlaneseq
      %v769 = vshrl.u32 %v768, 7
      %v770 = vsub.s32 %v323, %v769
      %v771 = vrot.slane %v691, %v770
      %v772 = vsel %vm328, %v771, %v767
      %v773 = vlaneseq
      %v774 = vshrl.u32 %v773, 7
      %v775 = vsub.s32 %v191, %v774
      %v776 = vrot.slane %v693, %v775
      %v777 = vlaneseq
      %v778 = vshrl.u32 %v777, 7
      %v779 = vsub.s32 %v323, %v778
      %v780 = vrot.slane %v695, %v779
      %v781 = vsel %vm328, %v780, %v776
      %v782 = vlaneseq
      %v783 = vshrl.u32 %v782, 7
      %v784 = vsub.s32 %v191, %v783
      %v785 = vrot.slane %v697, %v784
      %v786 = vlaneseq
      %v787 = vshrl.u32 %v786, 7
      %v788 = vsub.s32 %v323, %v787
      %v789 = vrot.slane %v699, %v788
      %v790 = vsel %vm328, %v789, %v785
      %v791 = vsel %vm393, %v736, %v727
      %v792 = vsel %vm395, %v745, %v791
      %v793 = vsel %vm397, %v754, %v792
      %v794 = vsel %vm399, %v763, %v793
      %v795 = vsel %vm401, %v772, %v794
      %v796 = vsel %vm403, %v781, %v795
      %v797 = vsel %vm405, %v790, %v796
      %v798 = vsel %vm407, %v797, 0
      %800 = vmatprep.subr.mxu0 0.0
      %801 = vmatpush1.msra.mxu0 %v701
      %802 = vmatprep.subr.mxu0 0.0
      %803 = vmatpush1.msra.mxu0 %v702
      %804 = vmatprep.subr.mxu0 0.0
      %805 = vmatpush1.msra.mxu0 0.0
      %806 = vmatprep.subr.mxu0 0.0
      %807 = vmatpush1.msra.mxu0 0.0
      %808 = vmatprep.subr.mxu0 0.0
      %809 = vmatpush1.msra.mxu0 0.0
      %810 = vmatprep.subr.mxu0 0.0
      %811 = vmatpush1.msra.mxu0 0.0
      %812 = vmatprep.subr.mxu0 0.0
      %813 = vmatpush1.msra.mxu0 0.0
      %814 = vmatprep.subr.mxu0 0.0
      %815 = vmatpush1.msra.mxu0 0.0
      %816 = vmatprep.subr.mxu0 0.0
      %817 = vmatpush1.msra.mxu0 0.0
      %818 = vmatprep.subr.mxu0 0.0
      %819 = vmatpush1.msra.mxu0 0.0
      %820 = vmatprep.subr.mxu0 0.0
      %821 = vmatpush1.msra.mxu0 0.0
      %822 = vmatprep.subr.mxu0 0.0
      %823 = vmatpush1.msra.mxu0 0.0
      %824 = vmatprep.subr.mxu0 0.0
      %825 = vmatpush1.msra.mxu0 0.0
      %826 = vmatprep.subr.mxu0 0.0
      %827 = vmatpush1.msra.mxu0 0.0
      %828 = vmatprep.subr.mxu0 0.0
      %829 = vmatpush1.msra.mxu0 0.0
      %830 = vmatprep.subr.mxu0 0.0
      %831 = vmatpush1.msra.mxu0 0.0
      %832 = vmatprep.subr.mxu0 0.0
      %833 = vmatpush1.msra.mxu0 0.0
      %834 = vmatprep.subr.mxu0 0.0
      %835 = vmatpush1.msra.mxu0 0.0
      %836 = vmatprep.subr.mxu0 0.0
      %837 = vmatpush1.msra.mxu0 0.0
      %838 = vmatprep.subr.mxu0 0.0
      %839 = vmatpush1.msra.mxu0 0.0
      %840 = vmatprep.subr.mxu0 0.0
      %841 = vmatpush1.msra.mxu0 0.0
      %842 = vmatprep.subr.mxu0 0.0
      %843 = vmatpush1.msra.mxu0 0.0
      %844 = vmatprep.subr.mxu0 0.0
      %845 = vmatpush1.msra.mxu0 0.0
      %846 = vmatprep.subr.mxu0 0.0
      %847 = vmatpush1.msra.mxu0 0.0
      %848 = vmatprep.subr.mxu0 0.0
      %849 = vmatpush1.msra.mxu0 0.0
      %850 = vmatprep.subr.mxu0 0.0
      %851 = vmatpush1.msra.mxu0 0.0
      %852 = vmatprep.subr.mxu0 0.0
      %853 = vmatpush1.msra.mxu0 0.0
      %854 = vmatprep.subr.mxu0 0.0
      %855 = vmatpush1.msra.mxu0 0.0
      %856 = vmatprep.subr.mxu0 0.0
      %857 = vmatpush1.msra.mxu0 0.0
      %858 = vmatprep.subr.mxu0 0.0
      %859 = vmatpush1.msra.mxu0 0.0
      %860 = vmatprep.subr.mxu0 0.0
      %861 = vmatpush1.msra.mxu0 0.0
      %862 = vmatprep.subr.mxu0 0.0
      %863 = vmatpush1.msra.mxu0 0.0
      %864 = vmatprep.mubr.f32.mxu0 0.0
      %865 = vmatmul.mubr.f32.gmra.mrb[0].mxu0 %v798
      %v866 = vpop.f32.mrb[0].mxu0
      %v867 = vadd.f32 0.0, %v866
      %v868 = vpop.f32.mrb[0].mxu0
      %869 = vdwg.mxu0
      %v870 = vadd.f32 %v644, %v867
      %vm871 = vcmp.ge.s32.totalorder %v191, 48
      %vm872 = vcmp.lt.s32.totalorder %v191, 64
      %vm873 = vmand %vm871, %vm872
      %v874 = vsel %vm873, 1, 0
      %vm875 = vcmp.eq.s32.totalorder %v874, 1
      %v876 = vsel %vm875, %v174, 0.0
      %v877 = vsel %vm875, %v175, 0.0
      %v878 = vsel %vm875, %v176, 0.0
      %v879 = vsel %vm875, %v177, 0.0
      %v880 = vsel %vm875, %v178, 0.0
      %v881 = vsel %vm875, %v179, 0.0
      %v882 = vsel %vm875, %v180, 0.0
      %v883 = vsel %vm875, %v181, 0.0
      %v884 = vsel %vm875, %v182, 0.0
      %v885 = vsel %vm875, %v183, 0.0
      %v886 = vsel %vm875, %v184, 0.0
      %v887 = vsel %vm875, %v185, 0.0
      %v888 = vsel %vm875, %v186, 0.0
      %v889 = vsel %vm875, %v187, 0.0
      %v890 = vsel %vm875, %v188, 0.0
      %v891 = vsel %vm875, %v189, 0.0
      %892 = vadd.xlane.f32.xlu0 %v876
      %v893 = vpop.xlane.xlu0 %892
      %894 = vadd.xlane.f32.xlu0 %v877
      %v895 = vpop.xlane.xlu0 %894
      %896 = vadd.xlane.f32.xlu0 %v878
      %v897 = vpop.xlane.xlu0 %896
      %898 = vadd.xlane.f32.xlu0 %v879
      %v899 = vpop.xlane.xlu0 %898
      %900 = vadd.xlane.f32.xlu0 %v880
      %v901 = vpop.xlane.xlu0 %900
      %902 = vadd.xlane.f32.xlu0 %v881
      %v903 = vpop.xlane.xlu0 %902
      %904 = vadd.xlane.f32.xlu0 %v882
      %v905 = vpop.xlane.xlu0 %904
      %906 = vadd.xlane.f32.xlu0 %v883
      %v907 = vpop.xlane.xlu0 %906
      %908 = vadd.xlane.f32.xlu0 %v884
      %v909 = vpop.xlane.xlu0 %908
      %910 = vadd.xlane.f32.xlu0 %v885
      %v911 = vpop.xlane.xlu0 %910
      %912 = vadd.xlane.f32.xlu0 %v886
      %v913 = vpop.xlane.xlu0 %912
      %914 = vadd.xlane.f32.xlu0 %v887
      %v915 = vpop.xlane.xlu0 %914
      %916 = vadd.xlane.f32.xlu0 %v888
      %v917 = vpop.xlane.xlu0 %916
      %918 = vadd.xlane.f32.xlu0 %v889
      %v919 = vpop.xlane.xlu0 %918
      %920 = vadd.xlane.f32.xlu0 %v890
      %v921 = vpop.xlane.xlu0 %920
      %922 = vadd.xlane.f32.xlu0 %v891
      %v923 = vpop.xlane.xlu0 %922
      %s924 = scalar_lea.vmem %s1, 48
      %v925 = vld [vmem:[%s924] sm:$0xff]
      %v926 = vld [vmem:[%s924 + $0x8] sm:$0xff]
      %v943 = vlaneseq
      %v944 = vshrl.u32 %v943, 7
      %v945 = vsub.s32 %v191, %v944
      %v946 = vrot.slane %v893, %v945
      %v947 = vlaneseq
      %v948 = vshrl.u32 %v947, 7
      %v949 = vsub.s32 %v323, %v948
      %v950 = vrot.slane %v895, %v949
      %v951 = vsel %vm328, %v950, %v946
      %v952 = vlaneseq
      %v953 = vshrl.u32 %v952, 7
      %v954 = vsub.s32 %v191, %v953
      %v955 = vrot.slane %v897, %v954
      %v956 = vlaneseq
      %v957 = vshrl.u32 %v956, 7
      %v958 = vsub.s32 %v323, %v957
      %v959 = vrot.slane %v899, %v958
      %v960 = vsel %vm328, %v959, %v955
      %v961 = vlaneseq
      %v962 = vshrl.u32 %v961, 7
      %v963 = vsub.s32 %v191, %v962
      %v964 = vrot.slane %v901, %v963
      %v965 = vlaneseq
      %v966 = vshrl.u32 %v965, 7
      %v967 = vsub.s32 %v323, %v966
      %v968 = vrot.slane %v903, %v967
      %v969 = vsel %vm328, %v968, %v964
      %v970 = vlaneseq
      %v971 = vshrl.u32 %v970, 7
      %v972 = vsub.s32 %v191, %v971
      %v973 = vrot.slane %v905, %v972
      %v974 = vlaneseq
      %v975 = vshrl.u32 %v974, 7
      %v976 = vsub.s32 %v323, %v975
      %v977 = vrot.slane %v907, %v976
      %v978 = vsel %vm328, %v977, %v973
      %v979 = vlaneseq
      %v980 = vshrl.u32 %v979, 7
      %v981 = vsub.s32 %v191, %v980
      %v982 = vrot.slane %v909, %v981
      %v983 = vlaneseq
      %v984 = vshrl.u32 %v983, 7
      %v985 = vsub.s32 %v323, %v984
      %v986 = vrot.slane %v911, %v985
      %v987 = vsel %vm328, %v986, %v982
      %v988 = vlaneseq
      %v989 = vshrl.u32 %v988, 7
      %v990 = vsub.s32 %v191, %v989
      %v991 = vrot.slane %v913, %v990
      %v992 = vlaneseq
      %v993 = vshrl.u32 %v992, 7
      %v994 = vsub.s32 %v323, %v993
      %v995 = vrot.slane %v915, %v994
      %v996 = vsel %vm328, %v995, %v991
      %v997 = vlaneseq
      %v998 = vshrl.u32 %v997, 7
      %v999 = vsub.s32 %v191, %v998
      %v1000 = vrot.slane %v917, %v999
      %v1001 = vlaneseq
      %v1002 = vshrl.u32 %v1001, 7
      %v1003 = vsub.s32 %v323, %v1002
      %v1004 = vrot.slane %v919, %v1003
      %v1005 = vsel %vm328, %v1004, %v1000
      %v1006 = vlaneseq
      %v1007 = vshrl.u32 %v1006, 7
      %v1008 = vsub.s32 %v191, %v1007
      %v1009 = vrot.slane %v921, %v1008
      %v1010 = vlaneseq
      %v1011 = vshrl.u32 %v1010, 7
      %v1012 = vsub.s32 %v323, %v1011
      %v1013 = vrot.slane %v923, %v1012
      %v1014 = vsel %vm328, %v1013, %v1009
      %v1015 = vsel %vm393, %v960, %v951
      %v1016 = vsel %vm395, %v969, %v1015
      %v1017 = vsel %vm397, %v978, %v1016
      %v1018 = vsel %vm399, %v987, %v1017
      %v1019 = vsel %vm401, %v996, %v1018
      %v1020 = vsel %vm403, %v1005, %v1019
      %v1021 = vsel %vm405, %v1014, %v1020
      %v1022 = vsel %vm407, %v1021, 0
      %1024 = vmatprep.subr.mxu0 0.0
      %1025 = vmatpush1.msra.mxu0 %v925
      %1026 = vmatprep.subr.mxu0 0.0
      %1027 = vmatpush1.msra.mxu0 %v926
      %1028 = vmatprep.subr.mxu0 0.0
      %1029 = vmatpush1.msra.mxu0 0.0
      %1030 = vmatprep.subr.mxu0 0.0
      %1031 = vmatpush1.msra.mxu0 0.0
      %1032 = vmatprep.subr.mxu0 0.0
      %1033 = vmatpush1.msra.mxu0 0.0
      %1034 = vmatprep.subr.mxu0 0.0
      %1035 = vmatpush1.msra.mxu0 0.0
      %1036 = vmatprep.subr.mxu0 0.0
      %1037 = vmatpush1.msra.mxu0 0.0
      %1038 = vmatprep.subr.mxu0 0.0
      %1039 = vmatpush1.msra.mxu0 0.0
      %1040 = vmatprep.subr.mxu0 0.0
      %1041 = vmatpush1.msra.mxu0 0.0
      %1042 = vmatprep.subr.mxu0 0.0
      %1043 = vmatpush1.msra.mxu0 0.0
      %1044 = vmatprep.subr.mxu0 0.0
      %1045 = vmatpush1.msra.mxu0 0.0
      %1046 = vmatprep.subr.mxu0 0.0
      %1047 = vmatpush1.msra.mxu0 0.0
      %1048 = vmatprep.subr.mxu0 0.0
      %1049 = vmatpush1.msra.mxu0 0.0
      %1050 = vmatprep.subr.mxu0 0.0
      %1051 = vmatpush1.msra.mxu0 0.0
      %1052 = vmatprep.subr.mxu0 0.0
      %1053 = vmatpush1.msra.mxu0 0.0
      %1054 = vmatprep.subr.mxu0 0.0
      %1055 = vmatpush1.msra.mxu0 0.0
      %1056 = vmatprep.subr.mxu0 0.0
      %1057 = vmatpush1.msra.mxu0 0.0
      %1058 = vmatprep.subr.mxu0 0.0
      %1059 = vmatpush1.msra.mxu0 0.0
      %1060 = vmatprep.subr.mxu0 0.0
      %1061 = vmatpush1.msra.mxu0 0.0
      %1062 = vmatprep.subr.mxu0 0.0
      %1063 = vmatpush1.msra.mxu0 0.0
      %1064 = vmatprep.subr.mxu0 0.0
      %1065 = vmatpush1.msra.mxu0 0.0
      %1066 = vmatprep.subr.mxu0 0.0
      %1067 = vmatpush1.msra.mxu0 0.0
      %1068 = vmatprep.subr.mxu0 0.0
      %1069 = vmatpush1.msra.mxu0 0.0
      %1070 = vmatprep.subr.mxu0 0.0
      %1071 = vmatpush1.msra.mxu0 0.0
      %1072 = vmatprep.subr.mxu0 0.0
      %1073 = vmatpush1.msra.mxu0 0.0
      %1074 = vmatprep.subr.mxu0 0.0
      %1075 = vmatpush1.msra.mxu0 0.0
      %1076 = vmatprep.subr.mxu0 0.0
      %1077 = vmatpush1.msra.mxu0 0.0
      %1078 = vmatprep.subr.mxu0 0.0
      %1079 = vmatpush1.msra.mxu0 0.0
      %1080 = vmatprep.subr.mxu0 0.0
      %1081 = vmatpush1.msra.mxu0 0.0
      %1082 = vmatprep.subr.mxu0 0.0
      %1083 = vmatpush1.msra.mxu0 0.0
      %1084 = vmatprep.subr.mxu0 0.0
      %1085 = vmatpush1.msra.mxu0 0.0
      %1086 = vmatprep.subr.mxu0 0.0
      %1087 = vmatpush1.msra.mxu0 0.0
      %1088 = vmatprep.mubr.f32.mxu0 0.0
      %1089 = vmatmul.mubr.f32.gmra.mrb[0].mxu0 %v1022
      %v1090 = vpop.f32.mrb[0].mxu0
      %v1091 = vadd.f32 0.0, %v1090
      %v1092 = vpop.f32.mrb[0].mxu0
      %1093 = vdwg.mxu0
      %v1094 = vadd.f32 %v870, %v1091
      %vm1095 = vcmp.ge.s32.totalorder %v191, 64
      %vm1096 = vcmp.lt.s32.totalorder %v191, 80
      %vm1097 = vmand %vm1095, %vm1096
      %v1098 = vsel %vm1097, 1, 0
      %vm1099 = vcmp.eq.s32.totalorder %v1098, 1
      %v1100 = vsel %vm1099, %v174, 0.0
      %v1101 = vsel %vm1099, %v175, 0.0
      %v1102 = vsel %vm1099, %v176, 0.0
      %v1103 = vsel %vm1099, %v177, 0.0
      %v1104 = vsel %vm1099, %v178, 0.0
      %v1105 = vsel %vm1099, %v179, 0.0
      %v1106 = vsel %vm1099, %v180, 0.0
      %v1107 = vsel %vm1099, %v181, 0.0
      %v1108 = vsel %vm1099, %v182, 0.0
      %v1109 = vsel %vm1099, %v183, 0.0
      %v1110 = vsel %vm1099, %v184, 0.0
      %v1111 = vsel %vm1099, %v185, 0.0
      %v1112 = vsel %vm1099, %v186, 0.0
      %v1113 = vsel %vm1099, %v187, 0.0
      %v1114 = vsel %vm1099, %v188, 0.0
      %v1115 = vsel %vm1099, %v189, 0.0
      %1116 = vadd.xlane.f32.xlu0 %v1100
      %v1117 = vpop.xlane.xlu0 %1116
      %1118 = vadd.xlane.f32.xlu0 %v1101
      %v1119 = vpop.xlane.xlu0 %1118
      %1120 = vadd.xlane.f32.xlu0 %v1102
      %v1121 = vpop.xlane.xlu0 %1120
      %1122 = vadd.xlane.f32.xlu0 %v1103
      %v1123 = vpop.xlane.xlu0 %1122
      %1124 = vadd.xlane.f32.xlu0 %v1104
      %v1125 = vpop.xlane.xlu0 %1124
      %1126 = vadd.xlane.f32.xlu0 %v1105
      %v1127 = vpop.xlane.xlu0 %1126
      %1128 = vadd.xlane.f32.xlu0 %v1106
      %v1129 = vpop.xlane.xlu0 %1128
      %1130 = vadd.xlane.f32.xlu0 %v1107
      %v1131 = vpop.xlane.xlu0 %1130
      %1132 = vadd.xlane.f32.xlu0 %v1108
      %v1133 = vpop.xlane.xlu0 %1132
      %1134 = vadd.xlane.f32.xlu0 %v1109
      %v1135 = vpop.xlane.xlu0 %1134
      %1136 = vadd.xlane.f32.xlu0 %v1110
      %v1137 = vpop.xlane.xlu0 %1136
      %1138 = vadd.xlane.f32.xlu0 %v1111
      %v1139 = vpop.xlane.xlu0 %1138
      %1140 = vadd.xlane.f32.xlu0 %v1112
      %v1141 = vpop.xlane.xlu0 %1140
      %1142 = vadd.xlane.f32.xlu0 %v1113
      %v1143 = vpop.xlane.xlu0 %1142
      %1144 = vadd.xlane.f32.xlu0 %v1114
      %v1145 = vpop.xlane.xlu0 %1144
      %1146 = vadd.xlane.f32.xlu0 %v1115
      %v1147 = vpop.xlane.xlu0 %1146
      %s1148 = scalar_lea.vmem %s1, 64
      %v1149 = vld [vmem:[%s1148] sm:$0xff]
      %v1150 = vld [vmem:[%s1148 + $0x8] sm:$0xff]
      %v1167 = vlaneseq
      %v1168 = vshrl.u32 %v1167, 7
      %v1169 = vsub.s32 %v191, %v1168
      %v1170 = vrot.slane %v1117, %v1169
      %v1171 = vlaneseq
      %v1172 = vshrl.u32 %v1171, 7
      %v1173 = vsub.s32 %v323, %v1172
      %v1174 = vrot.slane %v1119, %v1173
      %v1175 = vsel %vm328, %v1174, %v1170
      %v1176 = vlaneseq
      %v1177 = vshrl.u32 %v1176, 7
      %v1178 = vsub.s32 %v191, %v1177
      %v1179 = vrot.slane %v1121, %v1178
      %v1180 = vlaneseq
      %v1181 = vshrl.u32 %v1180, 7
      %v1182 = vsub.s32 %v323, %v1181
      %v1183 = vrot.slane %v1123, %v1182
      %v1184 = vsel %vm328, %v1183, %v1179
      %v1185 = vlaneseq
      %v1186 = vshrl.u32 %v1185, 7
      %v1187 = vsub.s32 %v191, %v1186
      %v1188 = vrot.slane %v1125, %v1187
      %v1189 = vlaneseq
      %v1190 = vshrl.u32 %v1189, 7
      %v1191 = vsub.s32 %v323, %v1190
      %v1192 = vrot.slane %v1127, %v1191
      %v1193 = vsel %vm328, %v1192, %v1188
      %v1194 = vlaneseq
      %v1195 = vshrl.u32 %v1194, 7
      %v1196 = vsub.s32 %v191, %v1195
      %v1197 = vrot.slane %v1129, %v1196
      %v1198 = vlaneseq
      %v1199 = vshrl.u32 %v1198, 7
      %v1200 = vsub.s32 %v323, %v1199
      %v1201 = vrot.slane %v1131, %v1200
      %v1202 = vsel %vm328, %v1201, %v1197
      %v1203 = vlaneseq
      %v1204 = vshrl.u32 %v1203, 7
      %v1205 = vsub.s32 %v191, %v1204
      %v1206 = vrot.slane %v1133, %v1205
      %v1207 = vlaneseq
      %v1208 = vshrl.u32 %v1207, 7
      %v1209 = vsub.s32 %v323, %v1208
      %v1210 = vrot.slane %v1135, %v1209
      %v1211 = vsel %vm328, %v1210, %v1206
      %v1212 = vlaneseq
      %v1213 = vshrl.u32 %v1212, 7
      %v1214 = vsub.s32 %v191, %v1213
      %v1215 = vrot.slane %v1137, %v1214
      %v1216 = vlaneseq
      %v1217 = vshrl.u32 %v1216, 7
      %v1218 = vsub.s32 %v323, %v1217
      %v1219 = vrot.slane %v1139, %v1218
      %v1220 = vsel %vm328, %v1219, %v1215
      %v1221 = vlaneseq
      %v1222 = vshrl.u32 %v1221, 7
      %v1223 = vsub.s32 %v191, %v1222
      %v1224 = vrot.slane %v1141, %v1223
      %v1225 = vlaneseq
      %v1226 = vshrl.u32 %v1225, 7
      %v1227 = vsub.s32 %v323, %v1226
      %v1228 = vrot.slane %v1143, %v1227
      %v1229 = vsel %vm328, %v1228, %v1224
      %v1230 = vlaneseq
      %v1231 = vshrl.u32 %v1230, 7
      %v1232 = vsub.s32 %v191, %v1231
      %v1233 = vrot.slane %v1145, %v1232
      %v1234 = vlaneseq
      %v1235 = vshrl.u32 %v1234, 7
      %v1236 = vsub.s32 %v323, %v1235
      %v1237 = vrot.slane %v1147, %v1236
      %v1238 = vsel %vm328, %v1237, %v1233
      %v1239 = vsel %vm393, %v1184, %v1175
      %v1240 = vsel %vm395, %v1193, %v1239
      %v1241 = vsel %vm397, %v1202, %v1240
      %v1242 = vsel %vm399, %v1211, %v1241
      %v1243 = vsel %vm401, %v1220, %v1242
      %v1244 = vsel %vm403, %v1229, %v1243
      %v1245 = vsel %vm405, %v1238, %v1244
      %v1246 = vsel %vm407, %v1245, 0
      %1248 = vmatprep.subr.mxu0 0.0
      %1249 = vmatpush1.msra.mxu0 %v1149
      %1250 = vmatprep.subr.mxu0 0.0
      %1251 = vmatpush1.msra.mxu0 %v1150
      %1252 = vmatprep.subr.mxu0 0.0
      %1253 = vmatpush1.msra.mxu0 0.0
      %1254 = vmatprep.subr.mxu0 0.0
      %1255 = vmatpush1.msra.mxu0 0.0
      %1256 = vmatprep.subr.mxu0 0.0
      %1257 = vmatpush1.msra.mxu0 0.0
      %1258 = vmatprep.subr.mxu0 0.0
      %1259 = vmatpush1.msra.mxu0 0.0
      %1260 = vmatprep.subr.mxu0 0.0
      %1261 = vmatpush1.msra.mxu0 0.0
      %1262 = vmatprep.subr.mxu0 0.0
      %1263 = vmatpush1.msra.mxu0 0.0
      %1264 = vmatprep.subr.mxu0 0.0
      %1265 = vmatpush1.msra.mxu0 0.0
      %1266 = vmatprep.subr.mxu0 0.0
      %1267 = vmatpush1.msra.mxu0 0.0
      %1268 = vmatprep.subr.mxu0 0.0
      %1269 = vmatpush1.msra.mxu0 0.0
      %1270 = vmatprep.subr.mxu0 0.0
      %1271 = vmatpush1.msra.mxu0 0.0
      %1272 = vmatprep.subr.mxu0 0.0
      %1273 = vmatpush1.msra.mxu0 0.0
      %1274 = vmatprep.subr.mxu0 0.0
      %1275 = vmatpush1.msra.mxu0 0.0
      %1276 = vmatprep.subr.mxu0 0.0
      %1277 = vmatpush1.msra.mxu0 0.0
      %1278 = vmatprep.subr.mxu0 0.0
      %1279 = vmatpush1.msra.mxu0 0.0
      %1280 = vmatprep.subr.mxu0 0.0
      %1281 = vmatpush1.msra.mxu0 0.0
      %1282 = vmatprep.subr.mxu0 0.0
      %1283 = vmatpush1.msra.mxu0 0.0
      %1284 = vmatprep.subr.mxu0 0.0
      %1285 = vmatpush1.msra.mxu0 0.0
      %1286 = vmatprep.subr.mxu0 0.0
      %1287 = vmatpush1.msra.mxu0 0.0
      %1288 = vmatprep.subr.mxu0 0.0
      %1289 = vmatpush1.msra.mxu0 0.0
      %1290 = vmatprep.subr.mxu0 0.0
      %1291 = vmatpush1.msra.mxu0 0.0
      %1292 = vmatprep.subr.mxu0 0.0
      %1293 = vmatpush1.msra.mxu0 0.0
      %1294 = vmatprep.subr.mxu0 0.0
      %1295 = vmatpush1.msra.mxu0 0.0
      %1296 = vmatprep.subr.mxu0 0.0
      %1297 = vmatpush1.msra.mxu0 0.0
      %1298 = vmatprep.subr.mxu0 0.0
      %1299 = vmatpush1.msra.mxu0 0.0
      %1300 = vmatprep.subr.mxu0 0.0
      %1301 = vmatpush1.msra.mxu0 0.0
      %1302 = vmatprep.subr.mxu0 0.0
      %1303 = vmatpush1.msra.mxu0 0.0
      %1304 = vmatprep.subr.mxu0 0.0
      %1305 = vmatpush1.msra.mxu0 0.0
      %1306 = vmatprep.subr.mxu0 0.0
      %1307 = vmatpush1.msra.mxu0 0.0
      %1308 = vmatprep.subr.mxu0 0.0
      %1309 = vmatpush1.msra.mxu0 0.0
      %1310 = vmatprep.subr.mxu0 0.0
      %1311 = vmatpush1.msra.mxu0 0.0
      %1312 = vmatprep.mubr.f32.mxu0 0.0
      %1313 = vmatmul.mubr.f32.gmra.mrb[0].mxu0 %v1246
      %v1314 = vpop.f32.mrb[0].mxu0
      %v1315 = vadd.f32 0.0, %v1314
      %v1316 = vpop.f32.mrb[0].mxu0
      %1317 = vdwg.mxu0
      %v1318 = vadd.f32 %v1094, %v1315
      %vm1319 = vcmp.ge.s32.totalorder %v191, 80
      %vm1320 = vcmp.lt.s32.totalorder %v191, 96
      %vm1321 = vmand %vm1319, %vm1320
      %v1322 = vsel %vm1321, 1, 0
      %vm1323 = vcmp.eq.s32.totalorder %v1322, 1
      %v1324 = vsel %vm1323, %v174, 0.0
      %v1325 = vsel %vm1323, %v175, 0.0
      %v1326 = vsel %vm1323, %v176, 0.0
      %v1327 = vsel %vm1323, %v177, 0.0
      %v1328 = vsel %vm1323, %v178, 0.0
      %v1329 = vsel %vm1323, %v179, 0.0
      %v1330 = vsel %vm1323, %v180, 0.0
      %v1331 = vsel %vm1323, %v181, 0.0
      %v1332 = vsel %vm1323, %v182, 0.0
      %v1333 = vsel %vm1323, %v183, 0.0
      %v1334 = vsel %vm1323, %v184, 0.0
      %v1335 = vsel %vm1323, %v185, 0.0
      %v1336 = vsel %vm1323, %v186, 0.0
      %v1337 = vsel %vm1323, %v187, 0.0
      %v1338 = vsel %vm1323, %v188, 0.0
      %v1339 = vsel %vm1323, %v189, 0.0
      %1340 = vadd.xlane.f32.xlu0 %v1324
      %v1341 = vpop.xlane.xlu0 %1340
      %1342 = vadd.xlane.f32.xlu0 %v1325
      %v1343 = vpop.xlane.xlu0 %1342
      %1344 = vadd.xlane.f32.xlu0 %v1326
      %v1345 = vpop.xlane.xlu0 %1344
      %1346 = vadd.xlane.f32.xlu0 %v1327
      %v1347 = vpop.xlane.xlu0 %1346
      %1348 = vadd.xlane.f32.xlu0 %v1328
      %v1349 = vpop.xlane.xlu0 %1348
      %1350 = vadd.xlane.f32.xlu0 %v1329
      %v1351 = vpop.xlane.xlu0 %1350
      %1352 = vadd.xlane.f32.xlu0 %v1330
      %v1353 = vpop.xlane.xlu0 %1352
      %1354 = vadd.xlane.f32.xlu0 %v1331
      %v1355 = vpop.xlane.xlu0 %1354
      %1356 = vadd.xlane.f32.xlu0 %v1332
      %v1357 = vpop.xlane.xlu0 %1356
      %1358 = vadd.xlane.f32.xlu0 %v1333
      %v1359 = vpop.xlane.xlu0 %1358
      %1360 = vadd.xlane.f32.xlu0 %v1334
      %v1361 = vpop.xlane.xlu0 %1360
      %1362 = vadd.xlane.f32.xlu0 %v1335
      %v1363 = vpop.xlane.xlu0 %1362
      %1364 = vadd.xlane.f32.xlu0 %v1336
      %v1365 = vpop.xlane.xlu0 %1364
      %1366 = vadd.xlane.f32.xlu0 %v1337
      %v1367 = vpop.xlane.xlu0 %1366
      %1368 = vadd.xlane.f32.xlu0 %v1338
      %v1369 = vpop.xlane.xlu0 %1368
      %1370 = vadd.xlane.f32.xlu0 %v1339
      %v1371 = vpop.xlane.xlu0 %1370
      %s1372 = scalar_lea.vmem %s1, 80
      %v1373 = vld [vmem:[%s1372] sm:$0xff]
      %v1374 = vld [vmem:[%s1372 + $0x8] sm:$0xff]
      %v1391 = vlaneseq
      %v1392 = vshrl.u32 %v1391, 7
      %v1393 = vsub.s32 %v191, %v1392
      %v1394 = vrot.slane %v1341, %v1393
      %v1395 = vlaneseq
      %v1396 = vshrl.u32 %v1395, 7
      %v1397 = vsub.s32 %v323, %v1396
      %v1398 = vrot.slane %v1343, %v1397
      %v1399 = vsel %vm328, %v1398, %v1394
      %v1400 = vlaneseq
      %v1401 = vshrl.u32 %v1400, 7
      %v1402 = vsub.s32 %v191, %v1401
      %v1403 = vrot.slane %v1345, %v1402
      %v1404 = vlaneseq
      %v1405 = vshrl.u32 %v1404, 7
      %v1406 = vsub.s32 %v323, %v1405
      %v1407 = vrot.slane %v1347, %v1406
      %v1408 = vsel %vm328, %v1407, %v1403
      %v1409 = vlaneseq
      %v1410 = vshrl.u32 %v1409, 7
      %v1411 = vsub.s32 %v191, %v1410
      %v1412 = vrot.slane %v1349, %v1411
      %v1413 = vlaneseq
      %v1414 = vshrl.u32 %v1413, 7
      %v1415 = vsub.s32 %v323, %v1414
      %v1416 = vrot.slane %v1351, %v1415
      %v1417 = vsel %vm328, %v1416, %v1412
      %v1418 = vlaneseq
      %v1419 = vshrl.u32 %v1418, 7
      %v1420 = vsub.s32 %v191, %v1419
      %v1421 = vrot.slane %v1353, %v1420
      %v1422 = vlaneseq
      %v1423 = vshrl.u32 %v1422, 7
      %v1424 = vsub.s32 %v323, %v1423
      %v1425 = vrot.slane %v1355, %v1424
      %v1426 = vsel %vm328, %v1425, %v1421
      %v1427 = vlaneseq
      %v1428 = vshrl.u32 %v1427, 7
      %v1429 = vsub.s32 %v191, %v1428
      %v1430 = vrot.slane %v1357, %v1429
      %v1431 = vlaneseq
      %v1432 = vshrl.u32 %v1431, 7
      %v1433 = vsub.s32 %v323, %v1432
      %v1434 = vrot.slane %v1359, %v1433
      %v1435 = vsel %vm328, %v1434, %v1430
      %v1436 = vlaneseq
      %v1437 = vshrl.u32 %v1436, 7
      %v1438 = vsub.s32 %v191, %v1437
      %v1439 = vrot.slane %v1361, %v1438
      %v1440 = vlaneseq
      %v1441 = vshrl.u32 %v1440, 7
      %v1442 = vsub.s32 %v323, %v1441
      %v1443 = vrot.slane %v1363, %v1442
      %v1444 = vsel %vm328, %v1443, %v1439
      %v1445 = vlaneseq
      %v1446 = vshrl.u32 %v1445, 7
      %v1447 = vsub.s32 %v191, %v1446
      %v1448 = vrot.slane %v1365, %v1447
      %v1449 = vlaneseq
      %v1450 = vshrl.u32 %v1449, 7
      %v1451 = vsub.s32 %v323, %v1450
      %v1452 = vrot.slane %v1367, %v1451
      %v1453 = vsel %vm328, %v1452, %v1448
      %v1454 = vlaneseq
      %v1455 = vshrl.u32 %v1454, 7
      %v1456 = vsub.s32 %v191, %v1455
      %v1457 = vrot.slane %v1369, %v1456
      %v1458 = vlaneseq
      %v1459 = vshrl.u32 %v1458, 7
      %v1460 = vsub.s32 %v323, %v1459
      %v1461 = vrot.slane %v1371, %v1460
      %v1462 = vsel %vm328, %v1461, %v1457
      %v1463 = vsel %vm393, %v1408, %v1399
      %v1464 = vsel %vm395, %v1417, %v1463
      %v1465 = vsel %vm397, %v1426, %v1464
      %v1466 = vsel %vm399, %v1435, %v1465
      %v1467 = vsel %vm401, %v1444, %v1466
      %v1468 = vsel %vm403, %v1453, %v1467
      %v1469 = vsel %vm405, %v1462, %v1468
      %v1470 = vsel %vm407, %v1469, 0
      %1472 = vmatprep.subr.mxu0 0.0
      %1473 = vmatpush1.msra.mxu0 %v1373
      %1474 = vmatprep.subr.mxu0 0.0
      %1475 = vmatpush1.msra.mxu0 %v1374
      %1476 = vmatprep.subr.mxu0 0.0
      %1477 = vmatpush1.msra.mxu0 0.0
      %1478 = vmatprep.subr.mxu0 0.0
      %1479 = vmatpush1.msra.mxu0 0.0
      %1480 = vmatprep.subr.mxu0 0.0
      %1481 = vmatpush1.msra.mxu0 0.0
      %1482 = vmatprep.subr.mxu0 0.0
      %1483 = vmatpush1.msra.mxu0 0.0
      %1484 = vmatprep.subr.mxu0 0.0
      %1485 = vmatpush1.msra.mxu0 0.0
      %1486 = vmatprep.subr.mxu0 0.0
      %1487 = vmatpush1.msra.mxu0 0.0
      %1488 = vmatprep.subr.mxu0 0.0
      %1489 = vmatpush1.msra.mxu0 0.0
      %1490 = vmatprep.subr.mxu0 0.0
      %1491 = vmatpush1.msra.mxu0 0.0
      %1492 = vmatprep.subr.mxu0 0.0
      %1493 = vmatpush1.msra.mxu0 0.0
      %1494 = vmatprep.subr.mxu0 0.0
      %1495 = vmatpush1.msra.mxu0 0.0
      %1496 = vmatprep.subr.mxu0 0.0
      %1497 = vmatpush1.msra.mxu0 0.0
      %1498 = vmatprep.subr.mxu0 0.0
      %1499 = vmatpush1.msra.mxu0 0.0
      %1500 = vmatprep.subr.mxu0 0.0
      %1501 = vmatpush1.msra.mxu0 0.0
      %1502 = vmatprep.subr.mxu0 0.0
      %1503 = vmatpush1.msra.mxu0 0.0
      %1504 = vmatprep.subr.mxu0 0.0
      %1505 = vmatpush1.msra.mxu0 0.0
      %1506 = vmatprep.subr.mxu0 0.0
      %1507 = vmatpush1.msra.mxu0 0.0
      %1508 = vmatprep.subr.mxu0 0.0
      %1509 = vmatpush1.msra.mxu0 0.0
      %1510 = vmatprep.subr.mxu0 0.0
      %1511 = vmatpush1.msra.mxu0 0.0
      %1512 = vmatprep.subr.mxu0 0.0
      %1513 = vmatpush1.msra.mxu0 0.0
      %1514 = vmatprep.subr.mxu0 0.0
      %1515 = vmatpush1.msra.mxu0 0.0
      %1516 = vmatprep.subr.mxu0 0.0
      %1517 = vmatpush1.msra.mxu0 0.0
      %1518 = vmatprep.subr.mxu0 0.0
      %1519 = vmatpush1.msra.mxu0 0.0
      %1520 = vmatprep.subr.mxu0 0.0
      %1521 = vmatpush1.msra.mxu0 0.0
      %1522 = vmatprep.subr.mxu0 0.0
      %1523 = vmatpush1.msra.mxu0 0.0
      %1524 = vmatprep.subr.mxu0 0.0
      %1525 = vmatpush1.msra.mxu0 0.0
      %1526 = vmatprep.subr.mxu0 0.0
      %1527 = vmatpush1.msra.mxu0 0.0
      %1528 = vmatprep.subr.mxu0 0.0
      %1529 = vmatpush1.msra.mxu0 0.0
      %1530 = vmatprep.subr.mxu0 0.0
      %1531 = vmatpush1.msra.mxu0 0.0
      %1532 = vmatprep.subr.mxu0 0.0
      %1533 = vmatpush1.msra.mxu0 0.0
      %1534 = vmatprep.subr.mxu0 0.0
      %1535 = vmatpush1.msra.mxu0 0.0
      %1536 = vmatprep.mubr.f32.mxu0 0.0
      %1537 = vmatmul.mubr.f32.gmra.mrb[0].mxu0 %v1470
      %v1538 = vpop.f32.mrb[0].mxu0
      %v1539 = vadd.f32 0.0, %v1538
      %v1540 = vpop.f32.mrb[0].mxu0
      %1541 = vdwg.mxu0
      %v1542 = vadd.f32 %v1318, %v1539
      %vm1543 = vcmp.ge.s32.totalorder %v191, 96
      %vm1544 = vcmp.lt.s32.totalorder %v191, 112
      %vm1545 = vmand %vm1543, %vm1544
      %v1546 = vsel %vm1545, 1, 0
      %vm1547 = vcmp.eq.s32.totalorder %v1546, 1
      %v1548 = vsel %vm1547, %v174, 0.0
      %v1549 = vsel %vm1547, %v175, 0.0
      %v1550 = vsel %vm1547, %v176, 0.0
      %v1551 = vsel %vm1547, %v177, 0.0
      %v1552 = vsel %vm1547, %v178, 0.0
      %v1553 = vsel %vm1547, %v179, 0.0
      %v1554 = vsel %vm1547, %v180, 0.0
      %v1555 = vsel %vm1547, %v181, 0.0
      %v1556 = vsel %vm1547, %v182, 0.0
      %v1557 = vsel %vm1547, %v183, 0.0
      %v1558 = vsel %vm1547, %v184, 0.0
      %v1559 = vsel %vm1547, %v185, 0.0
      %v1560 = vsel %vm1547, %v186, 0.0
      %v1561 = vsel %vm1547, %v187, 0.0
      %v1562 = vsel %vm1547, %v188, 0.0
      %v1563 = vsel %vm1547, %v189, 0.0
      %1564 = vadd.xlane.f32.xlu0 %v1548
      %v1565 = vpop.xlane.xlu0 %1564
      %1566 = vadd.xlane.f32.xlu0 %v1549
      %v1567 = vpop.xlane.xlu0 %1566
      %1568 = vadd.xlane.f32.xlu0 %v1550
      %v1569 = vpop.xlane.xlu0 %1568
      %1570 = vadd.xlane.f32.xlu0 %v1551
      %v1571 = vpop.xlane.xlu0 %1570
      %1572 = vadd.xlane.f32.xlu0 %v1552
      %v1573 = vpop.xlane.xlu0 %1572
      %1574 = vadd.xlane.f32.xlu0 %v1553
      %v1575 = vpop.xlane.xlu0 %1574
      %1576 = vadd.xlane.f32.xlu0 %v1554
      %v1577 = vpop.xlane.xlu0 %1576
      %1578 = vadd.xlane.f32.xlu0 %v1555
      %v1579 = vpop.xlane.xlu0 %1578
      %1580 = vadd.xlane.f32.xlu0 %v1556
      %v1581 = vpop.xlane.xlu0 %1580
      %1582 = vadd.xlane.f32.xlu0 %v1557
      %v1583 = vpop.xlane.xlu0 %1582
      %1584 = vadd.xlane.f32.xlu0 %v1558
      %v1585 = vpop.xlane.xlu0 %1584
      %1586 = vadd.xlane.f32.xlu0 %v1559
      %v1587 = vpop.xlane.xlu0 %1586
      %1588 = vadd.xlane.f32.xlu0 %v1560
      %v1589 = vpop.xlane.xlu0 %1588
      %1590 = vadd.xlane.f32.xlu0 %v1561
      %v1591 = vpop.xlane.xlu0 %1590
      %1592 = vadd.xlane.f32.xlu0 %v1562
      %v1593 = vpop.xlane.xlu0 %1592
      %1594 = vadd.xlane.f32.xlu0 %v1563
      %v1595 = vpop.xlane.xlu0 %1594
      %s1596 = scalar_lea.vmem %s1, 96
      %v1597 = vld [vmem:[%s1596] sm:$0xff]
      %v1598 = vld [vmem:[%s1596 + $0x8] sm:$0xff]
      %v1615 = vlaneseq
      %v1616 = vshrl.u32 %v1615, 7
      %v1617 = vsub.s32 %v191, %v1616
      %v1618 = vrot.slane %v1565, %v1617
      %v1619 = vlaneseq
      %v1620 = vshrl.u32 %v1619, 7
      %v1621 = vsub.s32 %v323, %v1620
      %v1622 = vrot.slane %v1567, %v1621
      %v1623 = vsel %vm328, %v1622, %v1618
      %v1624 = vlaneseq
      %v1625 = vshrl.u32 %v1624, 7
      %v1626 = vsub.s32 %v191, %v1625
      %v1627 = vrot.slane %v1569, %v1626
      %v1628 = vlaneseq
      %v1629 = vshrl.u32 %v1628, 7
      %v1630 = vsub.s32 %v323, %v1629
      %v1631 = vrot.slane %v1571, %v1630
      %v1632 = vsel %vm328, %v1631, %v1627
      %v1633 = vlaneseq
      %v1634 = vshrl.u32 %v1633, 7
      %v1635 = vsub.s32 %v191, %v1634
      %v1636 = vrot.slane %v1573, %v1635
      %v1637 = vlaneseq
      %v1638 = vshrl.u32 %v1637, 7
      %v1639 = vsub.s32 %v323, %v1638
      %v1640 = vrot.slane %v1575, %v1639
      %v1641 = vsel %vm328, %v1640, %v1636
      %v1642 = vlaneseq
      %v1643 = vshrl.u32 %v1642, 7
      %v1644 = vsub.s32 %v191, %v1643
      %v1645 = vrot.slane %v1577, %v1644
      %v1646 = vlaneseq
      %v1647 = vshrl.u32 %v1646, 7
      %v1648 = vsub.s32 %v323, %v1647
      %v1649 = vrot.slane %v1579, %v1648
      %v1650 = vsel %vm328, %v1649, %v1645
      %v1651 = vlaneseq
      %v1652 = vshrl.u32 %v1651, 7
      %v1653 = vsub.s32 %v191, %v1652
      %v1654 = vrot.slane %v1581, %v1653
      %v1655 = vlaneseq
      %v1656 = vshrl.u32 %v1655, 7
      %v1657 = vsub.s32 %v323, %v1656
      %v1658 = vrot.slane %v1583, %v1657
      %v1659 = vsel %vm328, %v1658, %v1654
      %v1660 = vlaneseq
      %v1661 = vshrl.u32 %v1660, 7
      %v1662 = vsub.s32 %v191, %v1661
      %v1663 = vrot.slane %v1585, %v1662
      %v1664 = vlaneseq
      %v1665 = vshrl.u32 %v1664, 7
      %v1666 = vsub.s32 %v323, %v1665
      %v1667 = vrot.slane %v1587, %v1666
      %v1668 = vsel %vm328, %v1667, %v1663
      %v1669 = vlaneseq
      %v1670 = vshrl.u32 %v1669, 7
      %v1671 = vsub.s32 %v191, %v1670
      %v1672 = vrot.slane %v1589, %v1671
      %v1673 = vlaneseq
      %v1674 = vshrl.u32 %v1673, 7
      %v1675 = vsub.s32 %v323, %v1674
      %v1676 = vrot.slane %v1591, %v1675
      %v1677 = vsel %vm328, %v1676, %v1672
      %v1678 = vlaneseq
      %v1679 = vshrl.u32 %v1678, 7
      %v1680 = vsub.s32 %v191, %v1679
      %v1681 = vrot.slane %v1593, %v1680
      %v1682 = vlaneseq
      %v1683 = vshrl.u32 %v1682, 7
      %v1684 = vsub.s32 %v323, %v1683
      %v1685 = vrot.slane %v1595, %v1684
      %v1686 = vsel %vm328, %v1685, %v1681
      %v1687 = vsel %vm393, %v1632, %v1623
      %v1688 = vsel %vm395, %v1641, %v1687
      %v1689 = vsel %vm397, %v1650, %v1688
      %v1690 = vsel %vm399, %v1659, %v1689
      %v1691 = vsel %vm401, %v1668, %v1690
      %v1692 = vsel %vm403, %v1677, %v1691
      %v1693 = vsel %vm405, %v1686, %v1692
      %v1694 = vsel %vm407, %v1693, 0
      %1696 = vmatprep.subr.mxu0 0.0
      %1697 = vmatpush1.msra.mxu0 %v1597
      %1698 = vmatprep.subr.mxu0 0.0
      %1699 = vmatpush1.msra.mxu0 %v1598
      %1700 = vmatprep.subr.mxu0 0.0
      %1701 = vmatpush1.msra.mxu0 0.0
      %1702 = vmatprep.subr.mxu0 0.0
      %1703 = vmatpush1.msra.mxu0 0.0
      %1704 = vmatprep.subr.mxu0 0.0
      %1705 = vmatpush1.msra.mxu0 0.0
      %1706 = vmatprep.subr.mxu0 0.0
      %1707 = vmatpush1.msra.mxu0 0.0
      %1708 = vmatprep.subr.mxu0 0.0
      %1709 = vmatpush1.msra.mxu0 0.0
      %1710 = vmatprep.subr.mxu0 0.0
      %1711 = vmatpush1.msra.mxu0 0.0
      %1712 = vmatprep.subr.mxu0 0.0
      %1713 = vmatpush1.msra.mxu0 0.0
      %1714 = vmatprep.subr.mxu0 0.0
      %1715 = vmatpush1.msra.mxu0 0.0
      %1716 = vmatprep.subr.mxu0 0.0
      %1717 = vmatpush1.msra.mxu0 0.0
      %1718 = vmatprep.subr.mxu0 0.0
      %1719 = vmatpush1.msra.mxu0 0.0
      %1720 = vmatprep.subr.mxu0 0.0
      %1721 = vmatpush1.msra.mxu0 0.0
      %1722 = vmatprep.subr.mxu0 0.0
      %1723 = vmatpush1.msra.mxu0 0.0
      %1724 = vmatprep.subr.mxu0 0.0
      %1725 = vmatpush1.msra.mxu0 0.0
      %1726 = vmatprep.subr.mxu0 0.0
      %1727 = vmatpush1.msra.mxu0 0.0
      %1728 = vmatprep.subr.mxu0 0.0
      %1729 = vmatpush1.msra.mxu0 0.0
      %1730 = vmatprep.subr.mxu0 0.0
      %1731 = vmatpush1.msra.mxu0 0.0
      %1732 = vmatprep.subr.mxu0 0.0
      %1733 = vmatpush1.msra.mxu0 0.0
      %1734 = vmatprep.subr.mxu0 0.0
      %1735 = vmatpush1.msra.mxu0 0.0
      %1736 = vmatprep.subr.mxu0 0.0
      %1737 = vmatpush1.msra.mxu0 0.0
      %1738 = vmatprep.subr.mxu0 0.0
      %1739 = vmatpush1.msra.mxu0 0.0
      %1740 = vmatprep.subr.mxu0 0.0
      %1741 = vmatpush1.msra.mxu0 0.0
      %1742 = vmatprep.subr.mxu0 0.0
      %1743 = vmatpush1.msra.mxu0 0.0
      %1744 = vmatprep.subr.mxu0 0.0
      %1745 = vmatpush1.msra.mxu0 0.0
      %1746 = vmatprep.subr.mxu0 0.0
      %1747 = vmatpush1.msra.mxu0 0.0
      %1748 = vmatprep.subr.mxu0 0.0
      %1749 = vmatpush1.msra.mxu0 0.0
      %1750 = vmatprep.subr.mxu0 0.0
      %1751 = vmatpush1.msra.mxu0 0.0
      %1752 = vmatprep.subr.mxu0 0.0
      %1753 = vmatpush1.msra.mxu0 0.0
      %1754 = vmatprep.subr.mxu0 0.0
      %1755 = vmatpush1.msra.mxu0 0.0
      %1756 = vmatprep.subr.mxu0 0.0
      %1757 = vmatpush1.msra.mxu0 0.0
      %1758 = vmatprep.subr.mxu0 0.0
      %1759 = vmatpush1.msra.mxu0 0.0
      %1760 = vmatprep.mubr.f32.mxu0 0.0
      %1761 = vmatmul.mubr.f32.gmra.mrb[0].mxu0 %v1694
      %v1762 = vpop.f32.mrb[0].mxu0
      %v1763 = vadd.f32 0.0, %v1762
      %v1764 = vpop.f32.mrb[0].mxu0
      %1765 = vdwg.mxu0
      %v1766 = vadd.f32 %v1542, %v1763
      %vm1767 = vcmp.ge.s32.totalorder %v191, 112
      %vm1768 = vcmp.lt.s32.totalorder %v191, 128
      %vm1769 = vmand %vm1767, %vm1768
      %v1770 = vsel %vm1769, 1, 0
      %vm1771 = vcmp.eq.s32.totalorder %v1770, 1
      %v1772 = vsel %vm1771, %v174, 0.0
      %v1773 = vsel %vm1771, %v175, 0.0
      %v1774 = vsel %vm1771, %v176, 0.0
      %v1775 = vsel %vm1771, %v177, 0.0
      %v1776 = vsel %vm1771, %v178, 0.0
      %v1777 = vsel %vm1771, %v179, 0.0
      %v1778 = vsel %vm1771, %v180, 0.0
      %v1779 = vsel %vm1771, %v181, 0.0
      %v1780 = vsel %vm1771, %v182, 0.0
      %v1781 = vsel %vm1771, %v183, 0.0
      %v1782 = vsel %vm1771, %v184, 0.0
      %v1783 = vsel %vm1771, %v185, 0.0
      %v1784 = vsel %vm1771, %v186, 0.0
      %v1785 = vsel %vm1771, %v187, 0.0
      %v1786 = vsel %vm1771, %v188, 0.0
      %v1787 = vsel %vm1771, %v189, 0.0
      %1788 = vadd.xlane.f32.xlu0 %v1772
      %v1789 = vpop.xlane.xlu0 %1788
      %1790 = vadd.xlane.f32.xlu0 %v1773
      %v1791 = vpop.xlane.xlu0 %1790
      %1792 = vadd.xlane.f32.xlu0 %v1774
      %v1793 = vpop.xlane.xlu0 %1792
      %1794 = vadd.xlane.f32.xlu0 %v1775
      %v1795 = vpop.xlane.xlu0 %1794
      %1796 = vadd.xlane.f32.xlu0 %v1776
      %v1797 = vpop.xlane.xlu0 %1796
      %1798 = vadd.xlane.f32.xlu0 %v1777
      %v1799 = vpop.xlane.xlu0 %1798
      %1800 = vadd.xlane.f32.xlu0 %v1778
      %v1801 = vpop.xlane.xlu0 %1800
      %1802 = vadd.xlane.f32.xlu0 %v1779
      %v1803 = vpop.xlane.xlu0 %1802
      %1804 = vadd.xlane.f32.xlu0 %v1780
      %v1805 = vpop.xlane.xlu0 %1804
      %1806 = vadd.xlane.f32.xlu0 %v1781
      %v1807 = vpop.xlane.xlu0 %1806
      %1808 = vadd.xlane.f32.xlu0 %v1782
      %v1809 = vpop.xlane.xlu0 %1808
      %1810 = vadd.xlane.f32.xlu0 %v1783
      %v1811 = vpop.xlane.xlu0 %1810
      %1812 = vadd.xlane.f32.xlu0 %v1784
      %v1813 = vpop.xlane.xlu0 %1812
      %1814 = vadd.xlane.f32.xlu0 %v1785
      %v1815 = vpop.xlane.xlu0 %1814
      %1816 = vadd.xlane.f32.xlu0 %v1786
      %v1817 = vpop.xlane.xlu0 %1816
      %1818 = vadd.xlane.f32.xlu0 %v1787
      %v1819 = vpop.xlane.xlu0 %1818
      %s1820 = scalar_lea.vmem %s1, 112
      %v1821 = vld [vmem:[%s1820] sm:$0xff]
      %v1822 = vld [vmem:[%s1820 + $0x8] sm:$0xff]
      %v1839 = vlaneseq
      %v1840 = vshrl.u32 %v1839, 7
      %v1841 = vsub.s32 %v191, %v1840
      %v1842 = vrot.slane %v1789, %v1841
      %v1843 = vlaneseq
      %v1844 = vshrl.u32 %v1843, 7
      %v1845 = vsub.s32 %v323, %v1844
      %v1846 = vrot.slane %v1791, %v1845
      %v1847 = vsel %vm328, %v1846, %v1842
      %v1848 = vlaneseq
      %v1849 = vshrl.u32 %v1848, 7
      %v1850 = vsub.s32 %v191, %v1849
      %v1851 = vrot.slane %v1793, %v1850
      %v1852 = vlaneseq
      %v1853 = vshrl.u32 %v1852, 7
      %v1854 = vsub.s32 %v323, %v1853
      %v1855 = vrot.slane %v1795, %v1854
      %v1856 = vsel %vm328, %v1855, %v1851
      %v1857 = vlaneseq
      %v1858 = vshrl.u32 %v1857, 7
      %v1859 = vsub.s32 %v191, %v1858
      %v1860 = vrot.slane %v1797, %v1859
      %v1861 = vlaneseq
      %v1862 = vshrl.u32 %v1861, 7
      %v1863 = vsub.s32 %v323, %v1862
      %v1864 = vrot.slane %v1799, %v1863
      %v1865 = vsel %vm328, %v1864, %v1860
      %v1866 = vlaneseq
      %v1867 = vshrl.u32 %v1866, 7
      %v1868 = vsub.s32 %v191, %v1867
      %v1869 = vrot.slane %v1801, %v1868
      %v1870 = vlaneseq
      %v1871 = vshrl.u32 %v1870, 7
      %v1872 = vsub.s32 %v323, %v1871
      %v1873 = vrot.slane %v1803, %v1872
      %v1874 = vsel %vm328, %v1873, %v1869
      %v1875 = vlaneseq
      %v1876 = vshrl.u32 %v1875, 7
      %v1877 = vsub.s32 %v191, %v1876
      %v1878 = vrot.slane %v1805, %v1877
      %v1879 = vlaneseq
      %v1880 = vshrl.u32 %v1879, 7
      %v1881 = vsub.s32 %v323, %v1880
      %v1882 = vrot.slane %v1807, %v1881
      %v1883 = vsel %vm328, %v1882, %v1878
      %v1884 = vlaneseq
      %v1885 = vshrl.u32 %v1884, 7
      %v1886 = vsub.s32 %v191, %v1885
      %v1887 = vrot.slane %v1809, %v1886
      %v1888 = vlaneseq
      %v1889 = vshrl.u32 %v1888, 7
      %v1890 = vsub.s32 %v323, %v1889
      %v1891 = vrot.slane %v1811, %v1890
      %v1892 = vsel %vm328, %v1891, %v1887
      %v1893 = vlaneseq
      %v1894 = vshrl.u32 %v1893, 7
      %v1895 = vsub.s32 %v191, %v1894
      %v1896 = vrot.slane %v1813, %v1895
      %v1897 = vlaneseq
      %v1898 = vshrl.u32 %v1897, 7
      %v1899 = vsub.s32 %v323, %v1898
      %v1900 = vrot.slane %v1815, %v1899
      %v1901 = vsel %vm328, %v1900, %v1896
      %v1902 = vlaneseq
      %v1903 = vshrl.u32 %v1902, 7
      %v1904 = vsub.s32 %v191, %v1903
      %v1905 = vrot.slane %v1817, %v1904
      %v1906 = vlaneseq
      %v1907 = vshrl.u32 %v1906, 7
      %v1908 = vsub.s32 %v323, %v1907
      %v1909 = vrot.slane %v1819, %v1908
      %v1910 = vsel %vm328, %v1909, %v1905
      %v1911 = vsel %vm393, %v1856, %v1847
      %v1912 = vsel %vm395, %v1865, %v1911
      %v1913 = vsel %vm397, %v1874, %v1912
      %v1914 = vsel %vm399, %v1883, %v1913
      %v1915 = vsel %vm401, %v1892, %v1914
      %v1916 = vsel %vm403, %v1901, %v1915
      %v1917 = vsel %vm405, %v1910, %v1916
      %v1918 = vsel %vm407, %v1917, 0
      %1920 = vmatprep.subr.mxu0 0.0
      %1921 = vmatpush1.msra.mxu0 %v1821
      %1922 = vmatprep.subr.mxu0 0.0
      %1923 = vmatpush1.msra.mxu0 %v1822
      %1924 = vmatprep.subr.mxu0 0.0
      %1925 = vmatpush1.msra.mxu0 0.0
      %1926 = vmatprep.subr.mxu0 0.0
      %1927 = vmatpush1.msra.mxu0 0.0
      %1928 = vmatprep.subr.mxu0 0.0
      %1929 = vmatpush1.msra.mxu0 0.0
      %1930 = vmatprep.subr.mxu0 0.0
      %1931 = vmatpush1.msra.mxu0 0.0
      %1932 = vmatprep.subr.mxu0 0.0
      %1933 = vmatpush1.msra.mxu0 0.0
      %1934 = vmatprep.subr.mxu0 0.0
      %1935 = vmatpush1.msra.mxu0 0.0
      %1936 = vmatprep.subr.mxu0 0.0
      %1937 = vmatpush1.msra.mxu0 0.0
      %1938 = vmatprep.subr.mxu0 0.0
      %1939 = vmatpush1.msra.mxu0 0.0
      %1940 = vmatprep.subr.mxu0 0.0
      %1941 = vmatpush1.msra.mxu0 0.0
      %1942 = vmatprep.subr.mxu0 0.0
      %1943 = vmatpush1.msra.mxu0 0.0
      %1944 = vmatprep.subr.mxu0 0.0
      %1945 = vmatpush1.msra.mxu0 0.0
      %1946 = vmatprep.subr.mxu0 0.0
      %1947 = vmatpush1.msra.mxu0 0.0
      %1948 = vmatprep.subr.mxu0 0.0
      %1949 = vmatpush1.msra.mxu0 0.0
      %1950 = vmatprep.subr.mxu0 0.0
      %1951 = vmatpush1.msra.mxu0 0.0
      %1952 = vmatprep.subr.mxu0 0.0
      %1953 = vmatpush1.msra.mxu0 0.0
      %1954 = vmatprep.subr.mxu0 0.0
      %1955 = vmatpush1.msra.mxu0 0.0
      %1956 = vmatprep.subr.mxu0 0.0
      %1957 = vmatpush1.msra.mxu0 0.0
      %1958 = vmatprep.subr.mxu0 0.0
      %1959 = vmatpush1.msra.mxu0 0.0
      %1960 = vmatprep.subr.mxu0 0.0
      %1961 = vmatpush1.msra.mxu0 0.0
      %1962 = vmatprep.subr.mxu0 0.0
      %1963 = vmatpush1.msra.mxu0 0.0
      %1964 = vmatprep.subr.mxu0 0.0
      %1965 = vmatpush1.msra.mxu0 0.0
      %1966 = vmatprep.subr.mxu0 0.0
      %1967 = vmatpush1.msra.mxu0 0.0
      %1968 = vmatprep.subr.mxu0 0.0
      %1969 = vmatpush1.msra.mxu0 0.0
      %1970 = vmatprep.subr.mxu0 0.0
      %1971 = vmatpush1.msra.mxu0 0.0
      %1972 = vmatprep.subr.mxu0 0.0
      %1973 = vmatpush1.msra.mxu0 0.0
      %1974 = vmatprep.subr.mxu0 0.0
      %1975 = vmatpush1.msra.mxu0 0.0
      %1976 = vmatprep.subr.mxu0 0.0
      %1977 = vmatpush1.msra.mxu0 0.0
      %1978 = vmatprep.subr.mxu0 0.0
      %1979 = vmatpush1.msra.mxu0 0.0
      %1980 = vmatprep.subr.mxu0 0.0
      %1981 = vmatpush1.msra.mxu0 0.0
      %1982 = vmatprep.subr.mxu0 0.0
      %1983 = vmatpush1.msra.mxu0 0.0
      %1984 = vmatprep.mubr.f32.mxu0 0.0
      %1985 = vmatmul.mubr.f32.gmra.mrb[0].mxu0 %v1918
      %v1986 = vpop.f32.mrb[0].mxu0
      %v1987 = vadd.f32 0.0, %v1986
      %v1988 = vpop.f32.mrb[0].mxu0
      %1989 = vdwg.mxu0
      %v1990 = vadd.f32 %v1766, %v1987
      %v1991 = vmul.f32 %v1990, 0.0625
      %v1992 = vld [vmem:[%s2] sm:$0x1]
      %v1994 = vlaneseq
      %v1995 = vshrl.u32 %v1994, 7
      %v1996 = vsub.s32 0, %v1995
      %v1997 = vrot.slane %v1992, %v1996
      %v1999 = vadd.f32 %v1991, %v1997
      %2000 = vst [vmem:[%s173] sm:$0xff] %v1999
      %p2001 = scmp.lt.s32.totalorder %s14, 1
      %s2002 = scalar_select %p2001, %s14, 1
      %s2003 = smul.addr %s2002, 8
      %s2004 = scalar_lea.vmem %s3, %s2003
      // Predicated region
      $region33: #{encoder_cnn_forward.2} parent=31 // pred_check
        %p2005 = pneg %p100
      $region34: #{encoder_cnn_forward.2} parent=31 // pred_check_branch
        %2007 = sbr.rel (%p2005) target = $region36
      $region35: #{encoder_cnn_forward.2} parent=31 // pred_region
        _
      $region36: #{encoder_cnn_forward.2} parent=31 // pred_fallthru
        _
    $region32: #{encoder_cnn_forward.2} parent=5 // pred_fallthru
      _
    %p2008 = scmp.le.s32.totalorder 2, %s9
    // Predicated region
    $region37: #{encoder_cnn_forward.2} parent=5 // pred_check
      %p2009 = pneg %p2008
    $region38: #{encoder_cnn_forward.2} parent=5 // pred_check_branch
      %2011 = sbr.rel (%p2009) target = $region40
    $region39: #{encoder_cnn_forward.2} parent=5 // pred_region
      %s2012 = ssub.s32 %s9, 2
      // Predicated region
      $region41: #{encoder_cnn_forward.2} parent=39 // pred_check
        %p2013 = pneg %p106
      $region42: #{encoder_cnn_forward.2} parent=39 // pred_check_branch
        %2015 = sbr.rel (%p2013) target = $region44
      $region43: #{encoder_cnn_forward.2} parent=39 // pred_region
        %p2016 = scmp.lt.s32.totalorder %s15, 1
        %s2017 = scalar_select %p2016, %s15, 1
        %s2018 = smul.addr %s2017, 8
        %s2019 = scalar_lea.vmem %s3, %s2018
      $region44: #{encoder_cnn_forward.2} parent=39 // pred_fallthru
        _
    $region40: #{encoder_cnn_forward.2} parent=5 // pred_fallthru
      _
  $region6: #{encoder_cnn_forward.2} parent=0 // loop_footer
    %s13 = sadd.s32 1, %s9
  $region7: #{encoder_cnn_forward.2} parent=0 // loop_footer_branch
    %8 = sbr.rel target = $region3
  $region8: #{encoder_cnn_forward.2} parent=0 // loop_exit
    _

</llo_original>
